<compile_context>
chip_gen: v6e
topology: v6e:2x2x1
jax: 0.10.0
libtpu: 0.0.40
codegen_flags: <defaults>
</compile_context>

<pallas_src>
import functools

import jax
import jax.numpy as jnp
from jax import lax
from jax.experimental import pallas as pl
from jax.experimental.pallas import tpu as pltpu


# ----------------------------- Pallas kernels ------------------------------ #

def _conv_relu_pool_kernel(p_ref, w_ref, b_ref, o_ref, *, m8):
    # p_ref: (1, 4*m8, Kp) bf16 im2col patches for ONE image.  Rows
    #        [g*m8, (g+1)*m8) hold the pooled-grid positions for pool-window
    #        offset g in {(0,0),(0,1),(1,0),(1,1)}.
    # w_ref: (Kp, 128) bf16 (cols >= Cout and rows >= K are zero padding).
    # b_ref: (1, 128) f32.
    # o_ref: (1, m8, 128) bf16 pooled + bias + ReLU activations.
    a = jnp.dot(p_ref[0], w_ref[...], preferred_element_type=jnp.float32)
    a = a.reshape(4, m8, 128)                     # m8 % 8 == 0 -> free view
    m = jnp.maximum(jnp.maximum(a[0], a[1]), jnp.maximum(a[2], a[3]))
    y = jnp.maximum(m + b_ref[...], 0.0)          # bias+ReLU after max: exact
    o_ref[0] = y.astype(o_ref.dtype)


def conv_relu_pool(patches, w, b, *, m8):
    """Fused valid-conv (one patch GEMM) + bias + ReLU + 2x2/2 max-pool.

    patches: (B, 4*m8, Kp) bf16.  Returns (B, m8, 128) bf16 (rows >= Ph*Pw and
    channels >= Cout are padding).
    """
    B, M4, Kp = patches.shape
    return pl.pallas_call(
        functools.partial(_conv_relu_pool_kernel, m8=m8),
        out_shape=jax.ShapeDtypeStruct((B, m8, 128), jnp.bfloat16),
        grid=(B,),
        in_specs=[
            pl.BlockSpec((1, M4, Kp), lambda i: (i, 0, 0)),
            pl.BlockSpec((Kp, 128), lambda i: (0, 0)),
            pl.BlockSpec((1, 128), lambda i: (0, 0)),
        ],
        out_specs=pl.BlockSpec((1, m8, 128), lambda i: (i, 0, 0)),
        compiler_params=pltpu.CompilerParams(
            dimension_semantics=("parallel",)),
    )(patches, w, b)


def _mlp_kernel(x_ref, w1_ref, b1_ref, w2_ref, b2_ref, w3_ref, b3_ref, o_ref):
    # Fused fc1 -> relu -> fc2 -> relu -> fc3, everything resident in VMEM.
    h = jnp.dot(x_ref[...], w1_ref[...], preferred_element_type=jnp.float32)
    h = jnp.maximum(h + b1_ref[...], 0.0)
    h = jnp.dot(h.astype(jnp.bfloat16), w2_ref[...],
                preferred_element_type=jnp.float32)
    h = jnp.maximum(h + b2_ref[...], 0.0)
    h = jnp.dot(h.astype(jnp.bfloat16), w3_ref[...],
                preferred_element_type=jnp.float32)
    o_ref[...] = h + b3_ref[...]


def mlp(x, w1, b1, w2, b2, w3, b3, *, bt=256):
    """x: (B, 512) bf16 -> (B, 128) f32 logits (cols >= 10 are padding)."""
    B, K = x.shape
    bt = B if B <= bt else bt
    pad = (-B) % bt
    if pad:
        x = jnp.pad(x, ((0, pad), (0, 0)))
    Bp = B + pad
    out = pl.pallas_call(
        _mlp_kernel,
        out_shape=jax.ShapeDtypeStruct((Bp, 128), jnp.float32),
        grid=(Bp // bt,),
        in_specs=[
            pl.BlockSpec((bt, K), lambda i: (i, 0)),
            pl.BlockSpec((K, 128), lambda i: (0, 0)),
            pl.BlockSpec((1, 128), lambda i: (0, 0)),
            pl.BlockSpec((128, 128), lambda i: (0, 0)),
            pl.BlockSpec((1, 128), lambda i: (0, 0)),
            pl.BlockSpec((128, 128), lambda i: (0, 0)),
            pl.BlockSpec((1, 128), lambda i: (0, 0)),
        ],
        out_specs=pl.BlockSpec((bt, 128), lambda i: (i, 0)),
        compiler_params=pltpu.CompilerParams(
            dimension_semantics=("parallel",)),
    )(x, w1, b1, w2, b2, w3, b3)
    return out[:B]


# ------------------------------- JAX glue ---------------------------------- #

def _pool_patches(x, dn, *, k, kp, m8):
    """One stride-1 im2col per conv, regrouped by 2x2-pool window offset.

    conv_general_dilated_patches orders the patch features as (Cin, kh, kw)
    (input channel slowest) — exactly torch weight.reshape(Cout, -1) order.
    Returns (B, 4*m8, kp): rows [g*m8, (g+1)*m8) hold the Ph*Pw pooled-grid
    patches for pool offset g (padded to m8 rows, kp lane-full features).
    """
    p = lax.conv_general_dilated_patches(
        x, (k, k), (1, 1), "VALID", dimension_numbers=dn)      # (B, Ho, Wo, K)
    B, Ho, Wo, K = p.shape
    Ph, Pw = Ho // 2, Wo // 2
    p = p.reshape(B, Ph, 2, Pw, 2, K).transpose(0, 2, 4, 1, 3, 5)
    p = p.reshape(B, 4, Ph * Pw, K)
    p = jnp.pad(p, ((0, 0), (0, 0), (0, m8 - Ph * Pw), (0, kp - K)))
    return p.reshape(B, 4 * m8, kp)


def init_params(key):
    def uniform(k, shape, fan_in):
        bound = 1.0 / jnp.sqrt(float(fan_in))
        return jax.random.uniform(k, shape, jnp.float32, -bound, bound)

    ks = jax.random.split(key, 10)
    # PyTorch-layout parameters (as nn.Conv2d / nn.Linear would hold them).
    raw = {
        "w1": uniform(ks[0], (6, 3, 5, 5), 75),    "b1": uniform(ks[1], (6,), 75),
        "w2": uniform(ks[2], (16, 6, 5, 5), 150),  "b2": uniform(ks[3], (16,), 150),
        "wf1": uniform(ks[4], (120, 400), 400),    "bf1": uniform(ks[5], (120,), 400),
        "wf2": uniform(ks[6], (84, 120), 120),     "bf2": uniform(ks[7], (84,), 120),
        "wf3": uniform(ks[8], (10, 84), 84),       "bf3": uniform(ks[9], (10,), 84),
    }

    def pad_to(a, rows, cols):
        return jnp.pad(a, ((0, rows - a.shape[0]), (0, cols - a.shape[1])))

    # conv weights: (Cout, Cin, k, k) -> (Kp, 128) bf16, zero padding elsewhere
    w1p = pad_to(raw["w1"].reshape(6, -1).T, 128, 128).astype(jnp.bfloat16)
    w2p = pad_to(raw["w2"].reshape(16, -1).T, 256, 128).astype(jnp.bfloat16)
    b1p = pad_to(raw["b1"].reshape(1, -1), 1, 128)
    b2p = pad_to(raw["b2"].reshape(1, -1), 1, 128)

    # fc1 consumes the pooled conv2 activation laid out as (m = ph*5+pw padded
    # to 32, c in [0,16)) flattened to 512 lanes; permute torch's (c,h,w) order
    # and zero the rows that correspond to padded spatial positions.
    wf1 = raw["wf1"].reshape(120, 16, 5, 5).transpose(0, 2, 3, 1)   # (120,5,5,16)
    wf1 = wf1.reshape(120, 25, 16)
    wf1 = jnp.pad(wf1, ((0, 0), (0, 7), (0, 0)))                    # (120,32,16)
    wf1p = pad_to(wf1.reshape(120, 512).T, 512, 128).astype(jnp.bfloat16)
    bf1p = pad_to(raw["bf1"].reshape(1, -1), 1, 128)

    wf2p = pad_to(raw["wf2"].T, 128, 128).astype(jnp.bfloat16)
    bf2p = pad_to(raw["bf2"].reshape(1, -1), 1, 128)
    wf3p = pad_to(raw["wf3"].T, 128, 128).astype(jnp.bfloat16)
    bf3p = pad_to(raw["bf3"].reshape(1, -1), 1, 128)

    packed = {"w1": w1p, "b1": b1p, "w2": w2p, "b2": b2p,
              "wf1": wf1p, "bf1": bf1p, "wf2": wf2p, "bf2": bf2p,
              "wf3": wf3p, "bf3": bf3p}
    return packed, raw


@jax.jit
def net_forward(x, params):
    # x: (B, 3, 32, 32) float32 NCHW (PyTorch layout) -> (B, 10) float32
    B = x.shape[0]
    xb = x.astype(jnp.bfloat16)

    # conv1 (3->6, 5x5) + ReLU + 2x2/2 pool: one Pallas step per image, M=800
    p1 = _pool_patches(xb, ("NCHW", "HWIO", "NHWC"), k=5, kp=128, m8=200)
    y1 = conv_relu_pool(p1, params["w1"], params["b1"], m8=200)   # (B,200,128)
    y1 = y1[:, :196, :6].reshape(B, 14, 14, 6)                    # NHWC, valid

    # conv2 (6->16, 5x5) + ReLU + pool: M=128 per image
    p2 = _pool_patches(y1, ("NHWC", "HWIO", "NHWC"), k=5, kp=256, m8=32)
    y2 = conv_relu_pool(p2, params["w2"], params["b2"], m8=32)    # (B,32,128)

    # fused fc1->relu->fc2->relu->fc3; keep only the 16 real channels so fc1
    # contracts over 512 lanes (32 padded spatial rows x 16 ch), not 3200.
    f = y2[:, :, :16].reshape(B, 512)                             # (B,512) bf16
    out = mlp(f, params["wf1"], params["bf1"], params["wf2"], params["bf2"],
              params["wf3"], params["bf3"])                       # (B,128) f32
    return out[:, :10]


# ----------------------- pure-JAX f32 reference ----------------------------- #

def reference_forward(x, raw):
    def conv(x, w, b):
        y = lax.conv_general_dilated(
            x, w, (1, 1), "VALID", dimension_numbers=("NCHW", "OIHW", "NCHW"))
        return jax.nn.relu(y + b[None, :, None, None])

    def pool(x):
        B, C, H, W = x.shape
        return jnp.max(x.reshape(B, C, H // 2, 2, W // 2, 2), axis=(3, 5))

    y = pool(conv(x, raw["w1"], raw["b1"]))
    y = pool(conv(y, raw["w2"], raw["b2"]))
    f = y.reshape(y.shape[0], -1)                       # (B, 16*5*5), c-major
    h = jax.nn.relu(f @ raw["wf1"].T + raw["bf1"])
    h = jax.nn.relu(h @ raw["wf2"].T + raw["bf2"])
    return h @ raw["wf3"].T + raw["bf3"]


if __name__ == "__main__":
    key = jax.random.PRNGKey(0)
    k_x, k_p = jax.random.split(key)
    # forward implies 32x32 input (conv5 -> 28 -> pool 14 -> conv5 -> 10 -> pool 5)
    x = jax.random.normal(k_x, (2, 3, 32, 32), dtype=jnp.float32)
    params, raw = init_params(k_p)

    out = net_forward(x, params)
    jax.block_until_ready(out)
    assert out.shape == (2, 10) and out.dtype == jnp.float32

    # bf16-GEMM kernels vs pure-JAX f32 reference (generous tolerance for bf16)
    ref = reference_forward(x, raw)
    err = float(jnp.max(jnp.abs(out - ref)))
    assert err < 5e-2, f"mismatch vs reference: {err}"

    print("KERNEL_OK")
</pallas_src>

<mosaic_0001>
module attributes {stable_mosaic.version = 11 : i64} {
  func.func @_conv_relu_pool_kernel(%arg0: i32, %arg1: memref<1x800x128xbf16, #tpu.memory_space<vmem>>, %arg2: memref<128x128xbf16, #tpu.memory_space<vmem>>, %arg3: memref<1x128xf32, #tpu.memory_space<vmem>>, %arg4: memref<1x200x128xbf16, #tpu.memory_space<vmem>>) attributes {dimension_semantics = [#tpu.dimension_semantics<parallel>], iteration_bounds = array<i64: 2>, scalar_prefetch = 0 : i64, scratch_operands = 0 : i64, tpu.core_type = #tpu.core_type<tc>, window_params = [{transform_indices = @transform_0, window_bounds = array<i64: 1, 800, 128>}, {pipeline_mode = #tpu.pipeline_mode<synchronous>, transform_indices = @transform_1, window_bounds = array<i64: 128, 128>}, {pipeline_mode = #tpu.pipeline_mode<synchronous>, transform_indices = @transform_2, window_bounds = array<i64: 1, 128>}, {transform_indices = @transform_3, window_bounds = array<i64: 1, 200, 128>}]} {
    %c0 = arith.constant 0 : index
    %c0_0 = arith.constant 0 : index
    %c0_1 = arith.constant 0 : index
    %0 = vector.load %arg1[%c0, %c0_0, %c0_1] : memref<1x800x128xbf16, #tpu.memory_space<vmem>>, vector<1x800x128xbf16>
    %1 = vector.shape_cast %0 : vector<1x800x128xbf16> to vector<800x128xbf16>
    %c0_2 = arith.constant 0 : index
    %c0_3 = arith.constant 0 : index
    %2 = vector.load %arg2[%c0_2, %c0_3] : memref<128x128xbf16, #tpu.memory_space<vmem>>, vector<128x128xbf16>
    %cst = arith.constant dense<0.000000e+00> : vector<800x128xf32>
    %3 = tpu.matmul %1, %2, %cst {dimension_numbers = #tpu.dot_dimension_numbers<[1], [0], [0], [1], [0, 0, 1, 1], [], []>} : vector<800x128xbf16>, vector<128x128xbf16>, vector<800x128xf32> -> vector<800x128xf32>
    %4 = vector.shape_cast %3 : vector<800x128xf32> to vector<4x200x128xf32>
    %5 = vector.extract_strided_slice %4 {offsets = [0, 0, 0], sizes = [1, 200, 128], strides = [1, 1, 1]} : vector<4x200x128xf32> to vector<1x200x128xf32>
    %6 = vector.shape_cast %5 : vector<1x200x128xf32> to vector<200x128xf32>
    %7 = vector.extract_strided_slice %4 {offsets = [1, 0, 0], sizes = [1, 200, 128], strides = [1, 1, 1]} : vector<4x200x128xf32> to vector<1x200x128xf32>
    %8 = vector.shape_cast %7 : vector<1x200x128xf32> to vector<200x128xf32>
    %9 = arith.maximumf %6, %8 : vector<200x128xf32>
    %10 = vector.extract_strided_slice %4 {offsets = [2, 0, 0], sizes = [1, 200, 128], strides = [1, 1, 1]} : vector<4x200x128xf32> to vector<1x200x128xf32>
    %11 = vector.shape_cast %10 : vector<1x200x128xf32> to vector<200x128xf32>
    %12 = vector.extract_strided_slice %4 {offsets = [3, 0, 0], sizes = [1, 200, 128], strides = [1, 1, 1]} : vector<4x200x128xf32> to vector<1x200x128xf32>
    %13 = vector.shape_cast %12 : vector<1x200x128xf32> to vector<200x128xf32>
    %14 = arith.maximumf %11, %13 : vector<200x128xf32>
    %15 = arith.maximumf %9, %14 : vector<200x128xf32>
    %c0_4 = arith.constant 0 : index
    %c0_5 = arith.constant 0 : index
    %16 = vector.load %arg3[%c0_4, %c0_5] : memref<1x128xf32, #tpu.memory_space<vmem>>, vector<1x128xf32>
    %17 = vector.broadcast %16 : vector<1x128xf32> to vector<200x128xf32>
    %18 = arith.addf %15, %17 : vector<200x128xf32>
    %cst_6 = arith.constant 0.000000e+00 : f32
    %19 = vector.broadcast %cst_6 : f32 to vector<200x128xf32>
    %20 = arith.maximumf %18, %19 : vector<200x128xf32>
    %21 = arith.truncf %20 : vector<200x128xf32> to vector<200x128xbf16>
    %c0_7 = arith.constant 0 : index
    %c0_8 = arith.constant 0 : index
    %c0_9 = arith.constant 0 : index
    %22 = vector.load %arg4[%c0_7, %c0_8, %c0_9] : memref<1x200x128xbf16, #tpu.memory_space<vmem>>, vector<1x200x128xbf16>
    %23 = vector.shape_cast %22 : vector<1x200x128xbf16> to vector<200x128xbf16>
    %24 = vector.shape_cast %21 : vector<200x128xbf16> to vector<1x200x128xbf16>
    tpu.vector_store %arg4[%c0_7, %c0_8, %c0_9], %24 {strides = array<i32>} : memref<1x200x128xbf16, #tpu.memory_space<vmem>>, vector<1x200x128xbf16>,
    return
  }
  func.func @transform_0(%arg0: i32) -> (i32, i32, i32) {
    %c0_i32 = arith.constant 0 : i32
    %c0_i32_0 = arith.constant 0 : i32
    %c0_i32_1 = arith.constant 0 : i32
    return %arg0, %c0_i32, %c0_i32_0 : i32, i32, i32
  }
  func.func @transform_1(%arg0: i32) -> (i32, i32) {
    %c0_i32 = arith.constant 0 : i32
    %c0_i32_0 = arith.constant 0 : i32
    %c0_i32_1 = arith.constant 0 : i32
    return %c0_i32, %c0_i32_0 : i32, i32
  }
  func.func @transform_2(%arg0: i32) -> (i32, i32) {
    %c0_i32 = arith.constant 0 : i32
    %c0_i32_0 = arith.constant 0 : i32
    %c0_i32_1 = arith.constant 0 : i32
    return %c0_i32, %c0_i32_0 : i32, i32
  }
  func.func @transform_3(%arg0: i32) -> (i32, i32, i32) {
    %c0_i32 = arith.constant 0 : i32
    %c0_i32_0 = arith.constant 0 : i32
    %c0_i32_1 = arith.constant 0 : i32
    return %arg0, %c0_i32, %c0_i32_0 : i32, i32, i32
  }
}

module attributes {stable_mosaic.version = 11 : i64} {
  func.func @_conv_relu_pool_kernel(%arg0: i32, %arg1: memref<1x128x256xbf16, #tpu.memory_space<vmem>>, %arg2: memref<256x128xbf16, #tpu.memory_space<vmem>>, %arg3: memref<1x128xf32, #tpu.memory_space<vmem>>, %arg4: memref<1x32x128xbf16, #tpu.memory_space<vmem>>) attributes {dimension_semantics = [#tpu.dimension_semantics<parallel>], iteration_bounds = array<i64: 2>, scalar_prefetch = 0 : i64, scratch_operands = 0 : i64, tpu.core_type = #tpu.core_type<tc>, window_params = [{transform_indices = @transform_0, window_bounds = array<i64: 1, 128, 256>}, {pipeline_mode = #tpu.pipeline_mode<synchronous>, transform_indices = @transform_1, window_bounds = array<i64: 256, 128>}, {pipeline_mode = #tpu.pipeline_mode<synchronous>, transform_indices = @transform_2, window_bounds = array<i64: 1, 128>}, {transform_indices = @transform_3, window_bounds = array<i64: 1, 32, 128>}]} {
    %c0 = arith.constant 0 : index
    %c0_0 = arith.constant 0 : index
    %c0_1 = arith.constant 0 : index
    %0 = vector.load %arg1[%c0, %c0_0, %c0_1] : memref<1x128x256xbf16, #tpu.memory_space<vmem>>, vector<1x128x256xbf16>
    %1 = vector.shape_cast %0 : vector<1x128x256xbf16> to vector<128x256xbf16>
    %c0_2 = arith.constant 0 : index
    %c0_3 = arith.constant 0 : index
    %2 = vector.load %arg2[%c0_2, %c0_3] : memref<256x128xbf16, #tpu.memory_space<vmem>>, vector<256x128xbf16>
    %cst = arith.constant dense<0.000000e+00> : vector<128x128xf32>
    %3 = tpu.matmul %1, %2, %cst {dimension_numbers = #tpu.dot_dimension_numbers<[1], [0], [0], [1], [0, 0, 1, 1], [], []>} : vector<128x256xbf16>, vector<256x128xbf16>, vector<128x128xf32> -> vector<128x128xf32>
    %4 = vector.shape_cast %3 : vector<128x128xf32> to vector<4x32x128xf32>
    %5 = vector.extract_strided_slice %4 {offsets = [0, 0, 0], sizes = [1, 32, 128], strides = [1, 1, 1]} : vector<4x32x128xf32> to vector<1x32x128xf32>
    %6 = vector.shape_cast %5 : vector<1x32x128xf32> to vector<32x128xf32>
    %7 = vector.extract_strided_slice %4 {offsets = [1, 0, 0], sizes = [1, 32, 128], strides = [1, 1, 1]} : vector<4x32x128xf32> to vector<1x32x128xf32>
    %8 = vector.shape_cast %7 : vector<1x32x128xf32> to vector<32x128xf32>
    %9 = arith.maximumf %6, %8 : vector<32x128xf32>
    %10 = vector.extract_strided_slice %4 {offsets = [2, 0, 0], sizes = [1, 32, 128], strides = [1, 1, 1]} : vector<4x32x128xf32> to vector<1x32x128xf32>
    %11 = vector.shape_cast %10 : vector<1x32x128xf32> to vector<32x128xf32>
    %12 = vector.extract_strided_slice %4 {offsets = [3, 0, 0], sizes = [1, 32, 128], strides = [1, 1, 1]} : vector<4x32x128xf32> to vector<1x32x128xf32>
    %13 = vector.shape_cast %12 : vector<1x32x128xf32> to vector<32x128xf32>
    %14 = arith.maximumf %11, %13 : vector<32x128xf32>
    %15 = arith.maximumf %9, %14 : vector<32x128xf32>
    %c0_4 = arith.constant 0 : index
    %c0_5 = arith.constant 0 : index
    %16 = vector.load %arg3[%c0_4, %c0_5] : memref<1x128xf32, #tpu.memory_space<vmem>>, vector<1x128xf32>
    %17 = vector.broadcast %16 : vector<1x128xf32> to vector<32x128xf32>
    %18 = arith.addf %15, %17 : vector<32x128xf32>
    %cst_6 = arith.constant 0.000000e+00 : f32
    %19 = vector.broadcast %cst_6 : f32 to vector<32x128xf32>
    %20 = arith.maximumf %18, %19 : vector<32x128xf32>
    %21 = arith.truncf %20 : vector<32x128xf32> to vector<32x128xbf16>
    %c0_7 = arith.constant 0 : index
    %c0_8 = arith.constant 0 : index
    %c0_9 = arith.constant 0 : index
    %22 = vector.load %arg4[%c0_7, %c0_8, %c0_9] : memref<1x32x128xbf16, #tpu.memory_space<vmem>>, vector<1x32x128xbf16>
    %23 = vector.shape_cast %22 : vector<1x32x128xbf16> to vector<32x128xbf16>
    %24 = vector.shape_cast %21 : vector<32x128xbf16> to vector<1x32x128xbf16>
    tpu.vector_store %arg4[%c0_7, %c0_8, %c0_9], %24 {strides = array<i32>} : memref<1x32x128xbf16, #tpu.memory_space<vmem>>, vector<1x32x128xbf16>,
    return
  }
  func.func @transform_0(%arg0: i32) -> (i32, i32, i32) {
    %c0_i32 = arith.constant 0 : i32
    %c0_i32_0 = arith.constant 0 : i32
    %c0_i32_1 = arith.constant 0 : i32
    return %arg0, %c0_i32, %c0_i32_0 : i32, i32, i32
  }
  func.func @transform_1(%arg0: i32) -> (i32, i32) {
    %c0_i32 = arith.constant 0 : i32
    %c0_i32_0 = arith.constant 0 : i32
    %c0_i32_1 = arith.constant 0 : i32
    return %c0_i32, %c0_i32_0 : i32, i32
  }
  func.func @transform_2(%arg0: i32) -> (i32, i32) {
    %c0_i32 = arith.constant 0 : i32
    %c0_i32_0 = arith.constant 0 : i32
    %c0_i32_1 = arith.constant 0 : i32
    return %c0_i32, %c0_i32_0 : i32, i32
  }
  func.func @transform_3(%arg0: i32) -> (i32, i32, i32) {
    %c0_i32 = arith.constant 0 : i32
    %c0_i32_0 = arith.constant 0 : i32
    %c0_i32_1 = arith.constant 0 : i32
    return %arg0, %c0_i32, %c0_i32_0 : i32, i32, i32
  }
}

module attributes {stable_mosaic.version = 11 : i64} {
  func.func @_mlp_kernel(%arg0: i32, %arg1: memref<2x512xbf16, #tpu.memory_space<vmem>>, %arg2: memref<512x128xbf16, #tpu.memory_space<vmem>>, %arg3: memref<1x128xf32, #tpu.memory_space<vmem>>, %arg4: memref<128x128xbf16, #tpu.memory_space<vmem>>, %arg5: memref<1x128xf32, #tpu.memory_space<vmem>>, %arg6: memref<128x128xbf16, #tpu.memory_space<vmem>>, %arg7: memref<1x128xf32, #tpu.memory_space<vmem>>, %arg8: memref<2x128xf32, #tpu.memory_space<vmem>>) attributes {dimension_semantics = [#tpu.dimension_semantics<parallel>], iteration_bounds = array<i64: 1>, scalar_prefetch = 0 : i64, scratch_operands = 0 : i64, tpu.core_type = #tpu.core_type<tc>, window_params = [{transform_indices = @transform_0, window_bounds = array<i64: 2, 512>}, {pipeline_mode = #tpu.pipeline_mode<synchronous>, transform_indices = @transform_1, window_bounds = array<i64: 512, 128>}, {pipeline_mode = #tpu.pipeline_mode<synchronous>, transform_indices = @transform_2, window_bounds = array<i64: 1, 128>}, {pipeline_mode = #tpu.pipeline_mode<synchronous>, transform_indices = @transform_3, window_bounds = array<i64: 128, 128>}, {pipeline_mode = #tpu.pipeline_mode<synchronous>, transform_indices = @transform_4, window_bounds = array<i64: 1, 128>}, {pipeline_mode = #tpu.pipeline_mode<synchronous>, transform_indices = @transform_5, window_bounds = array<i64: 128, 128>}, {pipeline_mode = #tpu.pipeline_mode<synchronous>, transform_indices = @transform_6, window_bounds = array<i64: 1, 128>}, {transform_indices = @transform_7, window_bounds = array<i64: 2, 128>}]} {
    %c0 = arith.constant 0 : index
    %c0_0 = arith.constant 0 : index
    %0 = vector.load %arg1[%c0, %c0_0] : memref<2x512xbf16, #tpu.memory_space<vmem>>, vector<2x512xbf16>
    %c0_1 = arith.constant 0 : index
    %c0_2 = arith.constant 0 : index
    %1 = vector.load %arg2[%c0_1, %c0_2] : memref<512x128xbf16, #tpu.memory_space<vmem>>, vector<512x128xbf16>
    %cst = arith.constant dense<0.000000e+00> : vector<2x128xf32>
    %2 = tpu.matmul %0, %1, %cst {dimension_numbers = #tpu.dot_dimension_numbers<[1], [0], [0], [1], [0, 0, 1, 1], [], []>} : vector<2x512xbf16>, vector<512x128xbf16>, vector<2x128xf32> -> vector<2x128xf32>
    %c0_3 = arith.constant 0 : index
    %c0_4 = arith.constant 0 : index
    %3 = vector.load %arg3[%c0_3, %c0_4] : memref<1x128xf32, #tpu.memory_space<vmem>>, vector<1x128xf32>
    %4 = vector.broadcast %3 : vector<1x128xf32> to vector<2x128xf32>
    %5 = arith.addf %2, %4 : vector<2x128xf32>
    %cst_5 = arith.constant 0.000000e+00 : f32
    %6 = vector.broadcast %cst_5 : f32 to vector<2x128xf32>
    %7 = arith.maximumf %5, %6 : vector<2x128xf32>
    %8 = arith.truncf %7 : vector<2x128xf32> to vector<2x128xbf16>
    %c0_6 = arith.constant 0 : index
    %c0_7 = arith.constant 0 : index
    %9 = vector.load %arg4[%c0_6, %c0_7] : memref<128x128xbf16, #tpu.memory_space<vmem>>, vector<128x128xbf16>
    %cst_8 = arith.constant dense<0.000000e+00> : vector<2x128xf32>
    %10 = tpu.matmul %8, %9, %cst_8 {dimension_numbers = #tpu.dot_dimension_numbers<[1], [0], [0], [1], [0, 0, 1, 1], [], []>} : vector<2x128xbf16>, vector<128x128xbf16>, vector<2x128xf32> -> vector<2x128xf32>
    %c0_9 = arith.constant 0 : index
    %c0_10 = arith.constant 0 : index
    %11 = vector.load %arg5[%c0_9, %c0_10] : memref<1x128xf32, #tpu.memory_space<vmem>>, vector<1x128xf32>
    %12 = vector.broadcast %11 : vector<1x128xf32> to vector<2x128xf32>
    %13 = arith.addf %10, %12 : vector<2x128xf32>
    %cst_11 = arith.constant 0.000000e+00 : f32
    %14 = vector.broadcast %cst_11 : f32 to vector<2x128xf32>
    %15 = arith.maximumf %13, %14 : vector<2x128xf32>
    %16 = arith.truncf %15 : vector<2x128xf32> to vector<2x128xbf16>
    %c0_12 = arith.constant 0 : index
    %c0_13 = arith.constant 0 : index
    %17 = vector.load %arg6[%c0_12, %c0_13] : memref<128x128xbf16, #tpu.memory_space<vmem>>, vector<128x128xbf16>
    %cst_14 = arith.constant dense<0.000000e+00> : vector<2x128xf32>
    %18 = tpu.matmul %16, %17, %cst_14 {dimension_numbers = #tpu.dot_dimension_numbers<[1], [0], [0], [1], [0, 0, 1, 1], [], []>} : vector<2x128xbf16>, vector<128x128xbf16>, vector<2x128xf32> -> vector<2x128xf32>
    %c0_15 = arith.constant 0 : index
    %c0_16 = arith.constant 0 : index
    %19 = vector.load %arg7[%c0_15, %c0_16] : memref<1x128xf32, #tpu.memory_space<vmem>>, vector<1x128xf32>
    %20 = vector.broadcast %19 : vector<1x128xf32> to vector<2x128xf32>
    %21 = arith.addf %18, %20 : vector<2x128xf32>
    %c0_17 = arith.constant 0 : index
    %c0_18 = arith.constant 0 : index
    %22 = vector.load %arg8[%c0_17, %c0_18] : memref<2x128xf32, #tpu.memory_space<vmem>>, vector<2x128xf32>
    tpu.vector_store %arg8[%c0_17, %c0_18], %21 {strides = array<i32>} : memref<2x128xf32, #tpu.memory_space<vmem>>, vector<2x128xf32>,
    return
  }
  func.func @transform_0(%arg0: i32) -> (i32, i32) {
    %c0_i32 = arith.constant 0 : i32
    %c0_i32_0 = arith.constant 0 : i32
    return %arg0, %c0_i32 : i32, i32
  }
  func.func @transform_1(%arg0: i32) -> (i32, i32) {
    %c0_i32 = arith.constant 0 : i32
    %c0_i32_0 = arith.constant 0 : i32
    %c0_i32_1 = arith.constant 0 : i32
    return %c0_i32, %c0_i32_0 : i32, i32
  }
  func.func @transform_2(%arg0: i32) -> (i32, i32) {
    %c0_i32 = arith.constant 0 : i32
    %c0_i32_0 = arith.constant 0 : i32
    %c0_i32_1 = arith.constant 0 : i32
    return %c0_i32, %c0_i32_0 : i32, i32
  }
  func.func @transform_3(%arg0: i32) -> (i32, i32) {
    %c0_i32 = arith.constant 0 : i32
    %c0_i32_0 = arith.constant 0 : i32
    %c0_i32_1 = arith.constant 0 : i32
    return %c0_i32, %c0_i32_0 : i32, i32
  }
  func.func @transform_4(%arg0: i32) -> (i32, i32) {
    %c0_i32 = arith.constant 0 : i32
    %c0_i32_0 = arith.constant 0 : i32
    %c0_i32_1 = arith.constant 0 : i32
    return %c0_i32, %c0_i32_0 : i32, i32
  }
  func.func @transform_5(%arg0: i32) -> (i32, i32) {
    %c0_i32 = arith.constant 0 : i32
    %c0_i32_0 = arith.constant 0 : i32
    %c0_i32_1 = arith.constant 0 : i32
    return %c0_i32, %c0_i32_0 : i32, i32
  }
  func.func @transform_6(%arg0: i32) -> (i32, i32) {
    %c0_i32 = arith.constant 0 : i32
    %c0_i32_0 = arith.constant 0 : i32
    %c0_i32_1 = arith.constant 0 : i32
    return %c0_i32, %c0_i32_0 : i32, i32
  }
  func.func @transform_7(%arg0: i32) -> (i32, i32) {
    %c0_i32 = arith.constant 0 : i32
    %c0_i32_0 = arith.constant 0 : i32
    return %arg0, %c0_i32 : i32, i32
  }
}

</mosaic_0001>

<llo_original>
// kernel: net_forward.3
$region0: #{net_forward.3}
  #allocation0 [shape = 'u32[]', space=smem, size = 0x4, offset = 0x4, fixed_abs, tag = 'smem constant byte address 0x4 - core index']
  #allocation1 [shape = 'u32[144,128]{1,0:T(1,128)}', space=vmem, size = 0x12000, scoped, tag = 'internal scratch']
  %s0 = inlined_call_operand.vmem [shape: bf16[2,800,128], index: 0, kind: input, shape index: {}]
  %s1 = inlined_call_operand.vmem [shape: bf16[128,128], index: 1, kind: input, shape index: {}]
  %s2 = inlined_call_operand.vmem [shape: f32[1,128], index: 2, kind: input, shape index: {}]
  %s3 = inlined_call_operand.vmem [shape: bf16[2,200,128], index: 3, kind: output, shape index: {}]
  %s4 = sld [smem:[#allocation0]]
  $region45: #{net_forward.3} parent=0
    _
  %s6 = ssub.s32 1, %s4
  %s7 = scalar_select 0, %s6, %s4
  loop: start=0, step=1, limit=4
  $region2: #{net_forward.3} parent=0 // loop_pre_header
    _
  $region3: #{net_forward.3} parent=0 // loop_header
    %s9 = sphi 0, %s13
    %p10 = scmp.ge.s32.totalorder %s9, 4
    %s19 = sphi 0, %s21
    %s22 = sphi 0, %s19
    %s23 = sphi 0, %s22
    %s39 = sphi 0, %s23
    %s43 = sphi 0, %s43
    %s45 = sphi 0, %s43
    %s46 = sphi 0, %s45
    %s60 = sphi 0, %s46
    %s64 = sphi 0, %s64
    %s66 = sphi 0, %s64
    %s67 = sphi 0, %s66
    %s81 = sphi 0, %s67
    %s87 = sphi 0, %s89
    %s90 = sphi 0, %s87
    %s91 = sphi 0, %s90
    %s107 = sphi 0, %s91
  $region4: #{net_forward.3} parent=0 // loop_header_branch
    %12 = sbr.rel (%p10) target = $region8
  $region5: #{net_forward.3} parent=0 // loop_body
    %s14 = ssub.s32 %s9, 1
    %s15 = ssub.s32 %s9, 2
    %s16 = sadd.s32 %s9, 1
    %s17 = ssub.s32 %s9, %s16
    %p18 = scmp.eq.s32.totalorder %s17, 0
    %s20 = sadd.s32 %s19, 1
    %s21 = scalar_select %p18, %s19, %s20
    %p24 = pneg %p18
    %p25 = scmp.eq.s32.totalorder %s9, 1
    %p26 = por %p24, %p25
    %p27 = scmp.ne.s32.totalorder %s19, %s22
    %p28 = scmp.eq.s32.totalorder %s9, 0
    %p29 = por %p27, %p28
    %p30 = scmp.ne.s32.totalorder %s19, %s22
    %p31 = scmp.eq.s32.totalorder %s14, 1
    %p32 = por %p30, %p31
    %p33 = scmp.ne.s32.totalorder %s22, %s23
    %p34 = scmp.eq.s32.totalorder %s14, 0
    %p35 = por %p33, %p34
    %p36 = scmp.ne.s32.totalorder %s22, %s23
    %p37 = scmp.eq.s32.totalorder %s15, 1
    %p38 = por %p36, %p37
    %p40 = scmp.ne.s32.totalorder %s23, %s39
    %p41 = scmp.eq.s32.totalorder %s15, 0
    %p42 = por %p40, %p41
    %s44 = sadd.s32 %s43, 1
    %p47 = scmp.eq.s32.totalorder %s9, 1
    %p48 = scmp.ne.s32.totalorder %s43, %s45
    %p49 = scmp.eq.s32.totalorder %s9, 0
    %p50 = por %p48, %p49
    %p51 = scmp.ne.s32.totalorder %s43, %s45
    %p52 = scmp.eq.s32.totalorder %s14, 1
    %p53 = por %p51, %p52
    %p54 = scmp.ne.s32.totalorder %s45, %s46
    %p55 = scmp.eq.s32.totalorder %s14, 0
    %p56 = por %p54, %p55
    %p57 = scmp.ne.s32.totalorder %s45, %s46
    %p58 = scmp.eq.s32.totalorder %s15, 1
    %p59 = por %p57, %p58
    %p61 = scmp.ne.s32.totalorder %s46, %s60
    %p62 = scmp.eq.s32.totalorder %s15, 0
    %p63 = por %p61, %p62
    %s65 = sadd.s32 %s64, 1
    %p68 = scmp.eq.s32.totalorder %s9, 1
    %p69 = scmp.ne.s32.totalorder %s64, %s66
    %p70 = scmp.eq.s32.totalorder %s9, 0
    %p71 = por %p69, %p70
    %p72 = scmp.ne.s32.totalorder %s64, %s66
    %p73 = scmp.eq.s32.totalorder %s14, 1
    %p74 = por %p72, %p73
    %p75 = scmp.ne.s32.totalorder %s66, %s67
    %p76 = scmp.eq.s32.totalorder %s14, 0
    %p77 = por %p75, %p76
    %p78 = scmp.ne.s32.totalorder %s66, %s67
    %p79 = scmp.eq.s32.totalorder %s15, 1
    %p80 = por %p78, %p79
    %p82 = scmp.ne.s32.totalorder %s67, %s81
    %p83 = scmp.eq.s32.totalorder %s15, 0
    %p84 = por %p82, %p83
    %s85 = ssub.s32 %s9, %s16
    %p86 = scmp.eq.s32.totalorder %s85, 0
    %s88 = sadd.s32 %s87, 1
    %s89 = scalar_select %p86, %s87, %s88
    %p92 = pneg %p86
    %p93 = scmp.eq.s32.totalorder %s9, 1
    %p94 = por %p92, %p93
    %p95 = scmp.ne.s32.totalorder %s87, %s90
    %p96 = scmp.eq.s32.totalorder %s9, 0
    %p97 = por %p95, %p96
    %p98 = scmp.ne.s32.totalorder %s87, %s90
    %p99 = scmp.eq.s32.totalorder %s14, 1
    %p100 = por %p98, %p99
    %p101 = scmp.ne.s32.totalorder %s90, %s91
    %p102 = scmp.eq.s32.totalorder %s14, 0
    %p103 = por %p101, %p102
    %p104 = scmp.ne.s32.totalorder %s90, %s91
    %p105 = scmp.eq.s32.totalorder %s15, 1
    %p106 = por %p104, %p105
    %p108 = scmp.ne.s32.totalorder %s91, %s107
    %p109 = scmp.eq.s32.totalorder %s15, 0
    %p110 = por %p108, %p109
    %p111 = scmp.le.s32.totalorder 1, %s9
    %p112 = scmp.lt.s32.totalorder %s9, 3
    %p113 = pnand %p111, %p112
    %p114 = pneg %p113
    // Predicated region
    $region9: #{net_forward.3} parent=5 // pred_check
      _
    $region10: #{net_forward.3} parent=5 // pred_check_branch
      %116 = sbr.rel (%p113) target = $region12
    $region11: #{net_forward.3} parent=5 // pred_region
      %s117 = ssub.s32 %s9, 1
      // Predicated region
      $region13: #{net_forward.3} parent=11 // pred_check
        %p118 = pneg %p56
      $region14: #{net_forward.3} parent=11 // pred_check_branch
        %120 = sbr.rel (%p118) target = $region16
      $region15: #{net_forward.3} parent=11 // pred_region
        _
      $region16: #{net_forward.3} parent=11 // pred_fallthru
        _
      // Predicated region
      $region17: #{net_forward.3} parent=11 // pred_check
        %p121 = pneg %p77
      $region18: #{net_forward.3} parent=11 // pred_check_branch
        %123 = sbr.rel (%p121) target = $region20
      $region19: #{net_forward.3} parent=11 // pred_region
        _
      $region20: #{net_forward.3} parent=11 // pred_fallthru
        _
    $region12: #{net_forward.3} parent=5 // pred_fallthru
      _
    %p124 = scmp.lt.s32.totalorder %s9, 2
    // Predicated region
    $region21: #{net_forward.3} parent=5 // pred_check
      %p125 = pneg %p124
    $region22: #{net_forward.3} parent=5 // pred_check_branch
      %127 = sbr.rel (%p125) target = $region24
    $region23: #{net_forward.3} parent=5 // pred_region
      // Predicated region
      $region25: #{net_forward.3} parent=23 // pred_check
        %p128 = pneg %p29
      $region26: #{net_forward.3} parent=23 // pred_check_branch
        %130 = sbr.rel (%p128) target = $region28
      $region27: #{net_forward.3} parent=23 // pred_region
        %p131 = scmp.lt.s32.totalorder %s9, 1
        %s132 = scalar_select %p131, %s9, 1
        %s133 = smul.addr %s132, 100
        %s134 = smul.addr %s133, 4
        %s135 = scalar_lea.vmem %s0, %s134
      $region28: #{net_forward.3} parent=23 // pred_fallthru
        _
    $region24: #{net_forward.3} parent=5 // pred_fallthru
      _
    %p136 = scmp.le.s32.totalorder 1, %s9
    %p137 = scmp.lt.s32.totalorder %s9, 3
    %p138 = pnand %p136, %p137
    %p139 = pneg %p138
    // Predicated region
    $region29: #{net_forward.3} parent=5 // pred_check
      _
    $region30: #{net_forward.3} parent=5 // pred_check_branch
      %141 = sbr.rel (%p138) target = $region32
    $region31: #{net_forward.3} parent=5 // pred_region
      %s142 = ssub.s32 %s9, 1
      %p143 = scmp.lt.s32.totalorder %s14, 1
      %s144 = scalar_select %p143, %s14, 1
      %s145 = smul.addr %s144, 100
      %s146 = smul.addr %s145, 4
      %s147 = scalar_lea.vmem %s0, %s146
      %p148 = pneg %p35
      %p149 = pneg %p32
      %p150 = pneg %p56
      %p151 = pneg %p53
      %p152 = pneg %p77
      %p153 = pneg %p74
      %p154 = pneg %p103
      %p155 = pneg %p100
      %p156 = scmp.lt.s32.totalorder %s14, 1
      %s157 = scalar_select %p156, %s14, 1
      %s158 = smul.addr %s157, 25
      %s159 = smul.addr %s158, 4
      %s160 = scalar_lea.vmem %s3, %s159
      %p161 = scmp.lt.s32.totalorder %s14, 1
      %s162 = scalar_select %p161, %s14, 1
      %s163 = smul.addr %s162, 100
      %s164 = smul.addr %s163, 4
      %s165 = scalar_lea.vmem %s0, %s164
      %p166 = scmp.lt.s32.totalorder %s14, 1
      %s167 = scalar_select %p166, %s14, 1
      %s168 = smul.addr %s167, 25
      %s169 = smul.addr %s168, 4
      %s170 = scalar_lea.vmem %s3, %s169
      %v172 = vld [vmem:[%s165] sm:$0xf]
      %v173 = vld [vmem:[%s165 + $0x4] sm:$0xf]
      %v174 = vld [vmem:[%s165 + $0x8] sm:$0xf]
      %v175 = vld [vmem:[%s165 + $0xc] sm:$0xf]
      %v176 = vld [vmem:[%s165 + $0x10] sm:$0xf]
      %v177 = vld [vmem:[%s165 + $0x14] sm:$0xf]
      %v178 = vld [vmem:[%s165 + $0x18] sm:$0xf]
      %v179 = vld [vmem:[%s165 + $0x1c] sm:$0xf]
      %v180 = vld [vmem:[%s165 + $0x20] sm:$0xf]
      %v181 = vld [vmem:[%s165 + $0x24] sm:$0xf]
      %v182 = vld [vmem:[%s165 + $0x28] sm:$0xf]
      %v183 = vld [vmem:[%s165 + $0x2c] sm:$0xf]
      %v184 = vld [vmem:[%s165 + $0x30] sm:$0xf]
      %v185 = vld [vmem:[%s165 + $0x34] sm:$0xf]
      %v186 = vld [vmem:[%s165 + $0x38] sm:$0xf]
      %v187 = vld [vmem:[%s165 + $0x3c] sm:$0xf]
      %v188 = vld [vmem:[%s165 + $0x40] sm:$0xf]
      %v189 = vld [vmem:[%s165 + $0x44] sm:$0xf]
      %v190 = vld [vmem:[%s165 + $0x48] sm:$0xf]
      %v191 = vld [vmem:[%s165 + $0x4c] sm:$0xf]
      %v192 = vld [vmem:[%s165 + $0x50] sm:$0xf]
      %v193 = vld [vmem:[%s165 + $0x54] sm:$0xf]
      %v194 = vld [vmem:[%s165 + $0x58] sm:$0xf]
      %v195 = vld [vmem:[%s165 + $0x5c] sm:$0xf]
      %v196 = vld [vmem:[%s165 + $0x60] sm:$0xf]
      %v197 = vld [vmem:[%s165 + $0x64] sm:$0xf]
      %v198 = vld [vmem:[%s165 + $0x68] sm:$0xf]
      %v199 = vld [vmem:[%s165 + $0x6c] sm:$0xf]
      %v200 = vld [vmem:[%s165 + $0x70] sm:$0xf]
      %v201 = vld [vmem:[%s165 + $0x74] sm:$0xf]
      %v202 = vld [vmem:[%s165 + $0x78] sm:$0xf]
      %v203 = vld [vmem:[%s165 + $0x7c] sm:$0xf]
      %v204 = vld [vmem:[%s165 + $0x80] sm:$0xf]
      %v205 = vld [vmem:[%s165 + $0x84] sm:$0xf]
      %v206 = vld [vmem:[%s165 + $0x88] sm:$0xf]
      %v207 = vld [vmem:[%s165 + $0x8c] sm:$0xf]
      %v208 = vld [vmem:[%s165 + $0x90] sm:$0xf]
      %v209 = vld [vmem:[%s165 + $0x94] sm:$0xf]
      %v210 = vld [vmem:[%s165 + $0x98] sm:$0xf]
      %v211 = vld [vmem:[%s165 + $0x9c] sm:$0xf]
      %v212 = vld [vmem:[%s165 + $0xa0] sm:$0xf]
      %v213 = vld [vmem:[%s165 + $0xa4] sm:$0xf]
      %v214 = vld [vmem:[%s165 + $0xa8] sm:$0xf]
      %v215 = vld [vmem:[%s165 + $0xac] sm:$0xf]
      %v216 = vld [vmem:[%s165 + $0xb0] sm:$0xf]
      %v217 = vld [vmem:[%s165 + $0xb4] sm:$0xf]
      %v218 = vld [vmem:[%s165 + $0xb8] sm:$0xf]
      %v219 = vld [vmem:[%s165 + $0xbc] sm:$0xf]
      %v220 = vld [vmem:[%s165 + $0xc0] sm:$0xf]
      %v221 = vld [vmem:[%s165 + $0xc4] sm:$0xf]
      %v222 = vld [vmem:[%s165 + $0xc8] sm:$0xf]
      %v223 = vld [vmem:[%s165 + $0xcc] sm:$0xf]
      %v224 = vld [vmem:[%s165 + $0xd0] sm:$0xf]
      %v225 = vld [vmem:[%s165 + $0xd4] sm:$0xf]
      %v226 = vld [vmem:[%s165 + $0xd8] sm:$0xf]
      %v227 = vld [vmem:[%s165 + $0xdc] sm:$0xf]
      %v228 = vld [vmem:[%s165 + $0xe0] sm:$0xf]
      %v229 = vld [vmem:[%s165 + $0xe4] sm:$0xf]
      %v230 = vld [vmem:[%s165 + $0xe8] sm:$0xf]
      %v231 = vld [vmem:[%s165 + $0xec] sm:$0xf]
      %v232 = vld [vmem:[%s165 + $0xf0] sm:$0xf]
      %v233 = vld [vmem:[%s165 + $0xf4] sm:$0xf]
      %v234 = vld [vmem:[%s165 + $0xf8] sm:$0xf]
      %v235 = vld [vmem:[%s165 + $0xfc] sm:$0xf]
      %v236 = vld [vmem:[%s165 + $0x100] sm:$0xf]
      %v237 = vld [vmem:[%s165 + $0x104] sm:$0xf]
      %v238 = vld [vmem:[%s165 + $0x108] sm:$0xf]
      %v239 = vld [vmem:[%s165 + $0x10c] sm:$0xf]
      %v240 = vld [vmem:[%s165 + $0x110] sm:$0xf]
      %v241 = vld [vmem:[%s165 + $0x114] sm:$0xf]
      %v242 = vld [vmem:[%s165 + $0x118] sm:$0xf]
      %v243 = vld [vmem:[%s165 + $0x11c] sm:$0xf]
      %v244 = vld [vmem:[%s165 + $0x120] sm:$0xf]
      %v245 = vld [vmem:[%s165 + $0x124] sm:$0xf]
      %v246 = vld [vmem:[%s165 + $0x128] sm:$0xf]
      %v247 = vld [vmem:[%s165 + $0x12c] sm:$0xf]
      %v248 = vld [vmem:[%s165 + $0x130] sm:$0xf]
      %v249 = vld [vmem:[%s165 + $0x134] sm:$0xf]
      %v250 = vld [vmem:[%s165 + $0x138] sm:$0xf]
      %v251 = vld [vmem:[%s165 + $0x13c] sm:$0xf]
      %v252 = vld [vmem:[%s165 + $0x140] sm:$0xf]
      %v253 = vld [vmem:[%s165 + $0x144] sm:$0xf]
      %v254 = vld [vmem:[%s165 + $0x148] sm:$0xf]
      %v255 = vld [vmem:[%s165 + $0x14c] sm:$0xf]
      %v256 = vld [vmem:[%s165 + $0x150] sm:$0xf]
      %v257 = vld [vmem:[%s165 + $0x154] sm:$0xf]
      %v258 = vld [vmem:[%s165 + $0x158] sm:$0xf]
      %v259 = vld [vmem:[%s165 + $0x15c] sm:$0xf]
      %v260 = vld [vmem:[%s165 + $0x160] sm:$0xf]
      %v261 = vld [vmem:[%s165 + $0x164] sm:$0xf]
      %v262 = vld [vmem:[%s165 + $0x168] sm:$0xf]
      %v263 = vld [vmem:[%s165 + $0x16c] sm:$0xf]
      %v264 = vld [vmem:[%s165 + $0x170] sm:$0xf]
      %v265 = vld [vmem:[%s165 + $0x174] sm:$0xf]
      %v266 = vld [vmem:[%s165 + $0x178] sm:$0xf]
      %v267 = vld [vmem:[%s165 + $0x17c] sm:$0xf]
      %v268 = vld [vmem:[%s165 + $0x180] sm:$0xf]
      %v269 = vld [vmem:[%s165 + $0x184] sm:$0xf]
      %v270 = vld [vmem:[%s165 + $0x188] sm:$0xf]
      %v271 = vld [vmem:[%s165 + $0x18c] sm:$0xf]
      %v272 = vld [vmem:[%s1] sm:$0xf]
      %v273 = vld [vmem:[%s1 + $0x4] sm:$0xf]
      %v274 = vld [vmem:[%s1 + $0x8] sm:$0xf]
      %v275 = vld [vmem:[%s1 + $0xc] sm:$0xf]
      %v276 = vld [vmem:[%s1 + $0x10] sm:$0xf]
      %v277 = vld [vmem:[%s1 + $0x14] sm:$0xf]
      %v278 = vld [vmem:[%s1 + $0x18] sm:$0xf]
      %v279 = vld [vmem:[%s1 + $0x1c] sm:$0xf]
      %v280 = vld [vmem:[%s1 + $0x20] sm:$0xf]
      %v281 = vld [vmem:[%s1 + $0x24] sm:$0xf]
      %v282 = vld [vmem:[%s1 + $0x28] sm:$0xf]
      %v283 = vld [vmem:[%s1 + $0x2c] sm:$0xf]
      %v284 = vld [vmem:[%s1 + $0x30] sm:$0xf]
      %v285 = vld [vmem:[%s1 + $0x34] sm:$0xf]
      %v286 = vld [vmem:[%s1 + $0x38] sm:$0xf]
      %v287 = vld [vmem:[%s1 + $0x3c] sm:$0xf]
      %v388 = vunpack.c.l.b16 %v172
      %v389 = vunpack.c.l.b16 %v173
      %v390 = vunpack.c.l.b16 %v174
      %v391 = vunpack.c.l.b16 %v175
      %v392 = vunpack.c.l.b16 %v176
      %v393 = vunpack.c.l.b16 %v177
      %v394 = vunpack.c.l.b16 %v178
      %v395 = vunpack.c.l.b16 %v179
      %v396 = vunpack.c.l.b16 %v180
      %v397 = vunpack.c.l.b16 %v181
      %v398 = vunpack.c.l.b16 %v182
      %v399 = vunpack.c.l.b16 %v183
      %v400 = vunpack.c.l.b16 %v184
      %v401 = vunpack.c.l.b16 %v185
      %v402 = vunpack.c.l.b16 %v186
      %v403 = vunpack.c.l.b16 %v187
      %v404 = vunpack.c.l.b16 %v188
      %v405 = vunpack.c.l.b16 %v189
      %v406 = vunpack.c.l.b16 %v190
      %v407 = vunpack.c.l.b16 %v191
      %v408 = vunpack.c.l.b16 %v192
      %v409 = vunpack.c.l.b16 %v193
      %v410 = vunpack.c.l.b16 %v194
      %v411 = vunpack.c.l.b16 %v195
      %v412 = vunpack.c.l.b16 %v196
      %v413 = vunpack.c.l.b16 %v197
      %v414 = vunpack.c.l.b16 %v198
      %v415 = vunpack.c.l.b16 %v199
      %v416 = vunpack.c.l.b16 %v200
      %v417 = vunpack.c.l.b16 %v201
      %v418 = vunpack.c.l.b16 %v202
      %v419 = vunpack.c.l.b16 %v203
      %v420 = vunpack.c.l.b16 %v204
      %v421 = vunpack.c.l.b16 %v205
      %v422 = vunpack.c.l.b16 %v206
      %v423 = vunpack.c.l.b16 %v207
      %v424 = vunpack.c.l.b16 %v208
      %v425 = vunpack.c.l.b16 %v209
      %v426 = vunpack.c.l.b16 %v210
      %v427 = vunpack.c.l.b16 %v211
      %v428 = vunpack.c.l.b16 %v212
      %v429 = vunpack.c.l.b16 %v213
      %v430 = vunpack.c.l.b16 %v214
      %v431 = vunpack.c.l.b16 %v215
      %v432 = vunpack.c.l.b16 %v216
      %v433 = vunpack.c.l.b16 %v217
      %v434 = vunpack.c.l.b16 %v218
      %v435 = vunpack.c.l.b16 %v219
      %v436 = vunpack.c.l.b16 %v220
      %v437 = vunpack.c.l.b16 %v221
      %v438 = vunpack.c.l.b16 %v222
      %v439 = vunpack.c.l.b16 %v223
      %v440 = vunpack.c.l.b16 %v224
      %v441 = vunpack.c.l.b16 %v225
      %v442 = vunpack.c.l.b16 %v226
      %v443 = vunpack.c.l.b16 %v227
      %v444 = vunpack.c.l.b16 %v228
      %v445 = vunpack.c.l.b16 %v229
      %v446 = vunpack.c.l.b16 %v230
      %v447 = vunpack.c.l.b16 %v231
      %v448 = vunpack.c.l.b16 %v232
      %v449 = vunpack.c.l.b16 %v233
      %v450 = vunpack.c.l.b16 %v234
      %v451 = vunpack.c.l.b16 %v235
      %v452 = vunpack.c.l.b16 %v236
      %v453 = vunpack.c.l.b16 %v237
      %v454 = vunpack.c.l.b16 %v238
      %v455 = vunpack.c.l.b16 %v239
      %v456 = vunpack.c.l.b16 %v240
      %v457 = vunpack.c.l.b16 %v241
      %v458 = vunpack.c.l.b16 %v242
      %v459 = vunpack.c.l.b16 %v243
      %v460 = vunpack.c.l.b16 %v244
      %v461 = vunpack.c.l.b16 %v245
      %v462 = vunpack.c.l.b16 %v246
      %v463 = vunpack.c.l.b16 %v247
      %v464 = vunpack.c.l.b16 %v248
      %v465 = vunpack.c.l.b16 %v249
      %v466 = vunpack.c.l.b16 %v250
      %v467 = vunpack.c.l.b16 %v251
      %v468 = vunpack.c.l.b16 %v252
      %v469 = vunpack.c.l.b16 %v253
      %v470 = vunpack.c.l.b16 %v254
      %v471 = vunpack.c.l.b16 %v255
      %v472 = vunpack.c.l.b16 %v256
      %v473 = vunpack.c.l.b16 %v257
      %v474 = vunpack.c.l.b16 %v258
      %v475 = vunpack.c.l.b16 %v259
      %v476 = vunpack.c.l.b16 %v260
      %v477 = vunpack.c.l.b16 %v261
      %v478 = vunpack.c.l.b16 %v262
      %v479 = vunpack.c.l.b16 %v263
      %v480 = vunpack.c.l.b16 %v264
      %v481 = vunpack.c.l.b16 %v265
      %v482 = vunpack.c.l.b16 %v266
      %v483 = vunpack.c.l.b16 %v267
      %v484 = vunpack.c.l.b16 %v268
      %v485 = vunpack.c.l.b16 %v269
      %v486 = vunpack.c.l.b16 %v270
      %v487 = vunpack.c.l.b16 %v271
      %v488 = vpack.c.b16 %v389, %v388
      %v489 = vpack.c.b16 %v391, %v390
      %v490 = vpack.c.b16 %v393, %v392
      %v491 = vpack.c.b16 %v395, %v394
      %v492 = vpack.c.b16 %v397, %v396
      %v493 = vpack.c.b16 %v399, %v398
      %v494 = vpack.c.b16 %v401, %v400
      %v495 = vpack.c.b16 %v403, %v402
      %v496 = vpack.c.b16 %v405, %v404
      %v497 = vpack.c.b16 %v407, %v406
      %v498 = vpack.c.b16 %v409, %v408
      %v499 = vpack.c.b16 %v411, %v410
      %v500 = vpack.c.b16 %v413, %v412
      %v501 = vpack.c.b16 %v415, %v414
      %v502 = vpack.c.b16 %v417, %v416
      %v503 = vpack.c.b16 %v419, %v418
      %v504 = vpack.c.b16 %v421, %v420
      %v505 = vpack.c.b16 %v423, %v422
      %v506 = vpack.c.b16 %v425, %v424
      %v507 = vpack.c.b16 %v427, %v426
      %v508 = vpack.c.b16 %v429, %v428
      %v509 = vpack.c.b16 %v431, %v430
      %v510 = vpack.c.b16 %v433, %v432
      %v511 = vpack.c.b16 %v435, %v434
      %v512 = vpack.c.b16 %v437, %v436
      %v513 = vpack.c.b16 %v439, %v438
      %v514 = vpack.c.b16 %v441, %v440
      %v515 = vpack.c.b16 %v443, %v442
      %v516 = vpack.c.b16 %v445, %v444
      %v517 = vpack.c.b16 %v447, %v446
      %v518 = vpack.c.b16 %v449, %v448
      %v519 = vpack.c.b16 %v451, %v450
      %v520 = vpack.c.b16 %v453, %v452
      %v521 = vpack.c.b16 %v455, %v454
      %v522 = vpack.c.b16 %v457, %v456
      %v523 = vpack.c.b16 %v459, %v458
      %v524 = vpack.c.b16 %v461, %v460
      %v525 = vpack.c.b16 %v463, %v462
      %v526 = vpack.c.b16 %v465, %v464
      %v527 = vpack.c.b16 %v467, %v466
      %v528 = vpack.c.b16 %v469, %v468
      %v529 = vpack.c.b16 %v471, %v470
      %v530 = vpack.c.b16 %v473, %v472
      %v531 = vpack.c.b16 %v475, %v474
      %v532 = vpack.c.b16 %v477, %v476
      %v533 = vpack.c.b16 %v479, %v478
      %v534 = vpack.c.b16 %v481, %v480
      %v535 = vpack.c.b16 %v483, %v482
      %v536 = vpack.c.b16 %v485, %v484
      %v537 = vpack.c.b16 %v487, %v486
      %v604 = vunpack.c.l.b16 %v272
      %v605 = vunpack.c.l.b16 %v273
      %v606 = vunpack.c.l.b16 %v274
      %v607 = vunpack.c.l.b16 %v275
      %v608 = vunpack.c.l.b16 %v276
      %v609 = vunpack.c.l.b16 %v277
      %v610 = vunpack.c.l.b16 %v278
      %v611 = vunpack.c.l.b16 %v279
      %v612 = vunpack.c.l.b16 %v280
      %v613 = vunpack.c.l.b16 %v281
      %v614 = vunpack.c.l.b16 %v282
      %v615 = vunpack.c.l.b16 %v283
      %v616 = vunpack.c.l.b16 %v284
      %v617 = vunpack.c.l.b16 %v285
      %v618 = vunpack.c.l.b16 %v286
      %v619 = vunpack.c.l.b16 %v287
      %v620 = vpack.c.b16 %v605, %v604
      %v621 = vpack.c.b16 %v607, %v606
      %v622 = vpack.c.b16 %v609, %v608
      %v623 = vpack.c.b16 %v611, %v610
      %v624 = vpack.c.b16 %v613, %v612
      %v625 = vpack.c.b16 %v615, %v614
      %v626 = vpack.c.b16 %v617, %v616
      %v627 = vpack.c.b16 %v619, %v618
      %636 = vmatprep.subr.bf16.mxu0 0
      %637 = vmatpush1.bf16.msra.mxu0 %v627
      %638 = vmatprep.subr.bf16.mxu0 0
      %639 = vmatpush1.bf16.msra.mxu0 %v626
      %640 = vmatprep.subr.bf16.mxu0 0
      %641 = vmatpush1.bf16.msra.mxu0 %v625
      %642 = vmatprep.subr.bf16.mxu0 0
      %643 = vmatpush1.bf16.msra.mxu0 %v624
      %644 = vmatprep.subr.bf16.mxu0 0
      %645 = vmatpush1.bf16.msra.mxu0 %v623
      %646 = vmatprep.subr.bf16.mxu0 0
      %647 = vmatpush1.bf16.msra.mxu0 %v622
      %648 = vmatprep.subr.bf16.mxu0 0
      %649 = vmatpush1.bf16.msra.mxu0 %v621
      %650 = vmatprep.subr.bf16.mxu0 0
      %651 = vmatpush1.bf16.msra.mxu0 %v620
      %652 = vmatprep.subr.bf16.mxu0 0
      %653 = vmatpush2.bf16.msra.mxu0 0
      %654 = vmatprep.subr.bf16.mxu0 0
      %655 = vmatpush2.bf16.msra.mxu0 0
      %656 = vmatprep.subr.bf16.mxu0 0
      %657 = vmatpush2.bf16.msra.mxu0 0
      %658 = vmatprep.subr.bf16.mxu0 0
      %659 = vmatpush2.bf16.msra.mxu0 0
      %660 = vmatprep.subr.bf16.mxu0 0
      %661 = vmatpush2.bf16.msra.mxu0 0
      %662 = vmatprep.subr.bf16.mxu0 0
      %663 = vmatpush2.bf16.msra.mxu0 0
      %664 = vmatprep.subr.bf16.mxu0 0
      %665 = vmatpush2.bf16.msra.mxu0 0
      %666 = vmatprep.subr.bf16.mxu0 0
      %667 = vmatpush2.bf16.msra.mxu0 0
      %668 = vmatprep.mubr.bf16.mxu0 0
      %669 = vmatmul.mubr.bf16.gmra.mxu0 %v488
      %v670 = vpop.f32.mrf.mxu0
      %v671 = vadd.f32 0.0, %v670
      %v672 = vpop.f32.mrf.mxu0
      %v673 = vpop.f32.mrf.mxu0
      %v674 = vadd.f32 0.0, %v673
      %v675 = vpop.f32.mrf.mxu0
      %676 = vmatprep.mubr.bf16.mxu0 0
      %677 = vmatmul.mubr.bf16.gmra.mxu0 %v489
      %v678 = vpop.f32.mrf.mxu0
      %v679 = vadd.f32 0.0, %v678
      %v680 = vpop.f32.mrf.mxu0
      %v681 = vpop.f32.mrf.mxu0
      %v682 = vadd.f32 0.0, %v681
      %v683 = vpop.f32.mrf.mxu0
      %684 = vmatprep.mubr.bf16.mxu0 0
      %685 = vmatmul.mubr.bf16.gmra.mxu0 %v490
      %v686 = vpop.f32.mrf.mxu0
      %v687 = vadd.f32 0.0, %v686
      %v688 = vpop.f32.mrf.mxu0
      %v689 = vpop.f32.mrf.mxu0
      %v690 = vadd.f32 0.0, %v689
      %v691 = vpop.f32.mrf.mxu0
      %692 = vmatprep.mubr.bf16.mxu0 0
      %693 = vmatmul.mubr.bf16.gmra.mxu0 %v491
      %v694 = vpop.f32.mrf.mxu0
      %v695 = vadd.f32 0.0, %v694
      %v696 = vpop.f32.mrf.mxu0
      %v697 = vpop.f32.mrf.mxu0
      %v698 = vadd.f32 0.0, %v697
      %v699 = vpop.f32.mrf.mxu0
      %700 = vmatprep.mubr.bf16.mxu0 0
      %701 = vmatmul.mubr.bf16.gmra.mxu0 %v492
      %v702 = vpop.f32.mrf.mxu0
      %v703 = vadd.f32 0.0, %v702
      %v704 = vpop.f32.mrf.mxu0
      %v705 = vpop.f32.mrf.mxu0
      %v706 = vadd.f32 0.0, %v705
      %v707 = vpop.f32.mrf.mxu0
      %708 = vmatprep.mubr.bf16.mxu0 0
      %709 = vmatmul.mubr.bf16.gmra.mxu0 %v493
      %v710 = vpop.f32.mrf.mxu0
      %v711 = vadd.f32 0.0, %v710
      %v712 = vpop.f32.mrf.mxu0
      %v713 = vpop.f32.mrf.mxu0
      %v714 = vadd.f32 0.0, %v713
      %v715 = vpop.f32.mrf.mxu0
      %716 = vmatprep.mubr.bf16.mxu0 0
      %717 = vmatmul.mubr.bf16.gmra.mxu0 %v494
      %v718 = vpop.f32.mrf.mxu0
      %v719 = vadd.f32 0.0, %v718
      %v720 = vpop.f32.mrf.mxu0
      %v721 = vpop.f32.mrf.mxu0
      %v722 = vadd.f32 0.0, %v721
      %v723 = vpop.f32.mrf.mxu0
      %724 = vmatprep.mubr.bf16.mxu0 0
      %725 = vmatmul.mubr.bf16.gmra.mxu0 %v495
      %v726 = vpop.f32.mrf.mxu0
      %v727 = vadd.f32 0.0, %v726
      %v728 = vpop.f32.mrf.mxu0
      %v729 = vpop.f32.mrf.mxu0
      %v730 = vadd.f32 0.0, %v729
      %v731 = vpop.f32.mrf.mxu0
      %732 = vmatprep.mubr.bf16.mxu0 0
      %733 = vmatmul.mubr.bf16.gmra.mxu0 %v496
      %v734 = vpop.f32.mrf.mxu0
      %v735 = vadd.f32 0.0, %v734
      %v736 = vpop.f32.mrf.mxu0
      %v737 = vpop.f32.mrf.mxu0
      %v738 = vadd.f32 0.0, %v737
      %v739 = vpop.f32.mrf.mxu0
      %740 = vmatprep.mubr.bf16.mxu0 0
      %741 = vmatmul.mubr.bf16.gmra.mxu0 %v497
      %v742 = vpop.f32.mrf.mxu0
      %v743 = vadd.f32 0.0, %v742
      %v744 = vpop.f32.mrf.mxu0
      %v745 = vpop.f32.mrf.mxu0
      %v746 = vadd.f32 0.0, %v745
      %v747 = vpop.f32.mrf.mxu0
      %748 = vmatprep.mubr.bf16.mxu0 0
      %749 = vmatmul.mubr.bf16.gmra.mxu0 %v498
      %v750 = vpop.f32.mrf.mxu0
      %v751 = vadd.f32 0.0, %v750
      %v752 = vpop.f32.mrf.mxu0
      %v753 = vpop.f32.mrf.mxu0
      %v754 = vadd.f32 0.0, %v753
      %v755 = vpop.f32.mrf.mxu0
      %756 = vmatprep.mubr.bf16.mxu0 0
      %757 = vmatmul.mubr.bf16.gmra.mxu0 %v499
      %v758 = vpop.f32.mrf.mxu0
      %v759 = vadd.f32 0.0, %v758
      %v760 = vpop.f32.mrf.mxu0
      %v761 = vpop.f32.mrf.mxu0
      %v762 = vadd.f32 0.0, %v761
      %v763 = vpop.f32.mrf.mxu0
      %764 = vmatprep.mubr.bf16.mxu0 0
      %765 = vmatmul.mubr.bf16.gmra.mxu0 %v500
      %v766 = vpop.f32.mrf.mxu0
      %v767 = vadd.f32 0.0, %v766
      %v768 = vpop.f32.mrf.mxu0
      %v769 = vpop.f32.mrf.mxu0
      %v770 = vadd.f32 0.0, %v769
      %v771 = vpop.f32.mrf.mxu0
      %772 = vmatprep.mubr.bf16.mxu0 0
      %773 = vmatmul.mubr.bf16.gmra.mxu0 %v501
      %v774 = vpop.f32.mrf.mxu0
      %v775 = vadd.f32 0.0, %v774
      %v776 = vpop.f32.mrf.mxu0
      %v777 = vpop.f32.mrf.mxu0
      %v778 = vadd.f32 0.0, %v777
      %v779 = vpop.f32.mrf.mxu0
      %780 = vmatprep.mubr.bf16.mxu0 0
      %781 = vmatmul.mubr.bf16.gmra.mxu0 %v502
      %v782 = vpop.f32.mrf.mxu0
      %v783 = vadd.f32 0.0, %v782
      %v784 = vpop.f32.mrf.mxu0
      %v785 = vpop.f32.mrf.mxu0
      %v786 = vadd.f32 0.0, %v785
      %v787 = vpop.f32.mrf.mxu0
      %788 = vmatprep.mubr.bf16.mxu0 0
      %789 = vmatmul.mubr.bf16.gmra.mxu0 %v503
      %v790 = vpop.f32.mrf.mxu0
      %v791 = vadd.f32 0.0, %v790
      %v792 = vpop.f32.mrf.mxu0
      %v793 = vpop.f32.mrf.mxu0
      %v794 = vadd.f32 0.0, %v793
      %v795 = vpop.f32.mrf.mxu0
      %796 = vmatprep.mubr.bf16.mxu0 0
      %797 = vmatmul.mubr.bf16.gmra.mxu0 %v504
      %v798 = vpop.f32.mrf.mxu0
      %v799 = vadd.f32 0.0, %v798
      %v800 = vpop.f32.mrf.mxu0
      %v801 = vpop.f32.mrf.mxu0
      %v802 = vadd.f32 0.0, %v801
      %v803 = vpop.f32.mrf.mxu0
      %804 = vmatprep.mubr.bf16.mxu0 0
      %805 = vmatmul.mubr.bf16.gmra.mxu0 %v505
      %v806 = vpop.f32.mrf.mxu0
      %v807 = vadd.f32 0.0, %v806
      %v808 = vpop.f32.mrf.mxu0
      %v809 = vpop.f32.mrf.mxu0
      %v810 = vadd.f32 0.0, %v809
      %v811 = vpop.f32.mrf.mxu0
      %812 = vmatprep.mubr.bf16.mxu0 0
      %813 = vmatmul.mubr.bf16.gmra.mxu0 %v506
      %v814 = vpop.f32.mrf.mxu0
      %v815 = vadd.f32 0.0, %v814
      %v816 = vpop.f32.mrf.mxu0
      %v817 = vpop.f32.mrf.mxu0
      %v818 = vadd.f32 0.0, %v817
      %v819 = vpop.f32.mrf.mxu0
      %820 = vmatprep.mubr.bf16.mxu0 0
      %821 = vmatmul.mubr.bf16.gmra.mxu0 %v507
      %v822 = vpop.f32.mrf.mxu0
      %v823 = vadd.f32 0.0, %v822
      %v824 = vpop.f32.mrf.mxu0
      %v825 = vpop.f32.mrf.mxu0
      %v826 = vadd.f32 0.0, %v825
      %v827 = vpop.f32.mrf.mxu0
      %828 = vmatprep.mubr.bf16.mxu0 0
      %829 = vmatmul.mubr.bf16.gmra.mxu0 %v508
      %v830 = vpop.f32.mrf.mxu0
      %v831 = vadd.f32 0.0, %v830
      %v832 = vpop.f32.mrf.mxu0
      %v833 = vpop.f32.mrf.mxu0
      %v834 = vadd.f32 0.0, %v833
      %v835 = vpop.f32.mrf.mxu0
      %836 = vmatprep.mubr.bf16.mxu0 0
      %837 = vmatmul.mubr.bf16.gmra.mxu0 %v509
      %v838 = vpop.f32.mrf.mxu0
      %v839 = vadd.f32 0.0, %v838
      %v840 = vpop.f32.mrf.mxu0
      %v841 = vpop.f32.mrf.mxu0
      %v842 = vadd.f32 0.0, %v841
      %v843 = vpop.f32.mrf.mxu0
      %844 = vmatprep.mubr.bf16.mxu0 0
      %845 = vmatmul.mubr.bf16.gmra.mxu0 %v510
      %v846 = vpop.f32.mrf.mxu0
      %v847 = vadd.f32 0.0, %v846
      %v848 = vpop.f32.mrf.mxu0
      %v849 = vpop.f32.mrf.mxu0
      %v850 = vadd.f32 0.0, %v849
      %v851 = vpop.f32.mrf.mxu0
      %852 = vmatprep.mubr.bf16.mxu0 0
      %853 = vmatmul.mubr.bf16.gmra.mxu0 %v511
      %v854 = vpop.f32.mrf.mxu0
      %v855 = vadd.f32 0.0, %v854
      %v856 = vpop.f32.mrf.mxu0
      %v857 = vpop.f32.mrf.mxu0
      %v858 = vadd.f32 0.0, %v857
      %v859 = vpop.f32.mrf.mxu0
      %860 = vmatprep.mubr.bf16.mxu0 0
      %861 = vmatmul.mubr.bf16.gmra.mxu0 %v512
      %v862 = vpop.f32.mrf.mxu0
      %v863 = vadd.f32 0.0, %v862
      %v864 = vpop.f32.mrf.mxu0
      %v865 = vpop.f32.mrf.mxu0
      %v866 = vadd.f32 0.0, %v865
      %v867 = vpop.f32.mrf.mxu0
      %868 = vmatprep.mubr.bf16.mxu0 0
      %869 = vmatmul.mubr.bf16.gmra.mxu0 %v513
      %v870 = vpop.f32.mrf.mxu0
      %v871 = vadd.f32 0.0, %v870
      %v872 = vpop.f32.mrf.mxu0
      %v873 = vpop.f32.mrf.mxu0
      %v874 = vadd.f32 0.0, %v873
      %v875 = vpop.f32.mrf.mxu0
      %876 = vmatprep.mubr.bf16.mxu0 0
      %877 = vmatmul.mubr.bf16.gmra.mxu0 %v514
      %v878 = vpop.f32.mrf.mxu0
      %v879 = vadd.f32 0.0, %v878
      %v880 = vpop.f32.mrf.mxu0
      %v881 = vpop.f32.mrf.mxu0
      %v882 = vadd.f32 0.0, %v881
      %v883 = vpop.f32.mrf.mxu0
      %884 = vmatprep.mubr.bf16.mxu0 0
      %885 = vmatmul.mubr.bf16.gmra.mxu0 %v515
      %v886 = vpop.f32.mrf.mxu0
      %v887 = vadd.f32 0.0, %v886
      %v888 = vpop.f32.mrf.mxu0
      %v889 = vpop.f32.mrf.mxu0
      %v890 = vadd.f32 0.0, %v889
      %v891 = vpop.f32.mrf.mxu0
      %892 = vmatprep.mubr.bf16.mxu0 0
      %893 = vmatmul.mubr.bf16.gmra.mxu0 %v516
      %v894 = vpop.f32.mrf.mxu0
      %v895 = vadd.f32 0.0, %v894
      %v896 = vpop.f32.mrf.mxu0
      %v897 = vpop.f32.mrf.mxu0
      %v898 = vadd.f32 0.0, %v897
      %v899 = vpop.f32.mrf.mxu0
      %900 = vmatprep.mubr.bf16.mxu0 0
      %901 = vmatmul.mubr.bf16.gmra.mxu0 %v517
      %v902 = vpop.f32.mrf.mxu0
      %v903 = vadd.f32 0.0, %v902
      %v904 = vpop.f32.mrf.mxu0
      %v905 = vpop.f32.mrf.mxu0
      %v906 = vadd.f32 0.0, %v905
      %v907 = vpop.f32.mrf.mxu0
      %908 = vmatprep.mubr.bf16.mxu0 0
      %909 = vmatmul.mubr.bf16.gmra.mxu0 %v518
      %v910 = vpop.f32.mrf.mxu0
      %v911 = vadd.f32 0.0, %v910
      %v912 = vpop.f32.mrf.mxu0
      %v913 = vpop.f32.mrf.mxu0
      %v914 = vadd.f32 0.0, %v913
      %v915 = vpop.f32.mrf.mxu0
      %916 = vmatprep.mubr.bf16.mxu0 0
      %917 = vmatmul.mubr.bf16.gmra.mxu0 %v519
      %v918 = vpop.f32.mrf.mxu0
      %v919 = vadd.f32 0.0, %v918
      %v920 = vpop.f32.mrf.mxu0
      %v921 = vpop.f32.mrf.mxu0
      %v922 = vadd.f32 0.0, %v921
      %v923 = vpop.f32.mrf.mxu0
      %924 = vmatprep.mubr.bf16.mxu0 0
      %925 = vmatmul.mubr.bf16.gmra.mxu0 %v520
      %v926 = vpop.f32.mrf.mxu0
      %v927 = vadd.f32 0.0, %v926
      %v928 = vpop.f32.mrf.mxu0
      %v929 = vpop.f32.mrf.mxu0
      %v930 = vadd.f32 0.0, %v929
      %v931 = vpop.f32.mrf.mxu0
      %932 = vmatprep.mubr.bf16.mxu0 0
      %933 = vmatmul.mubr.bf16.gmra.mxu0 %v521
      %v934 = vpop.f32.mrf.mxu0
      %v935 = vadd.f32 0.0, %v934
      %v936 = vpop.f32.mrf.mxu0
      %v937 = vpop.f32.mrf.mxu0
      %v938 = vadd.f32 0.0, %v937
      %v939 = vpop.f32.mrf.mxu0
      %940 = vmatprep.mubr.bf16.mxu0 0
      %941 = vmatmul.mubr.bf16.gmra.mxu0 %v522
      %v942 = vpop.f32.mrf.mxu0
      %v943 = vadd.f32 0.0, %v942
      %v944 = vpop.f32.mrf.mxu0
      %v945 = vpop.f32.mrf.mxu0
      %v946 = vadd.f32 0.0, %v945
      %v947 = vpop.f32.mrf.mxu0
      %948 = vmatprep.mubr.bf16.mxu0 0
      %949 = vmatmul.mubr.bf16.gmra.mxu0 %v523
      %v950 = vpop.f32.mrf.mxu0
      %v951 = vadd.f32 0.0, %v950
      %v952 = vpop.f32.mrf.mxu0
      %v953 = vpop.f32.mrf.mxu0
      %v954 = vadd.f32 0.0, %v953
      %v955 = vpop.f32.mrf.mxu0
      %956 = vmatprep.mubr.bf16.mxu0 0
      %957 = vmatmul.mubr.bf16.gmra.mxu0 %v524
      %v958 = vpop.f32.mrf.mxu0
      %v959 = vadd.f32 0.0, %v958
      %v960 = vpop.f32.mrf.mxu0
      %v961 = vpop.f32.mrf.mxu0
      %v962 = vadd.f32 0.0, %v961
      %v963 = vpop.f32.mrf.mxu0
      %964 = vmatprep.mubr.bf16.mxu0 0
      %965 = vmatmul.mubr.bf16.gmra.mxu0 %v525
      %v966 = vpop.f32.mrf.mxu0
      %v967 = vadd.f32 0.0, %v966
      %v968 = vpop.f32.mrf.mxu0
      %v969 = vpop.f32.mrf.mxu0
      %v970 = vadd.f32 0.0, %v969
      %v971 = vpop.f32.mrf.mxu0
      %972 = vmatprep.mubr.bf16.mxu0 0
      %973 = vmatmul.mubr.bf16.gmra.mxu0 %v526
      %v974 = vpop.f32.mrf.mxu0
      %v975 = vadd.f32 0.0, %v974
      %v976 = vpop.f32.mrf.mxu0
      %v977 = vpop.f32.mrf.mxu0
      %v978 = vadd.f32 0.0, %v977
      %v979 = vpop.f32.mrf.mxu0
      %980 = vmatprep.mubr.bf16.mxu0 0
      %981 = vmatmul.mubr.bf16.gmra.mxu0 %v527
      %v982 = vpop.f32.mrf.mxu0
      %v983 = vadd.f32 0.0, %v982
      %v984 = vpop.f32.mrf.mxu0
      %v985 = vpop.f32.mrf.mxu0
      %v986 = vadd.f32 0.0, %v985
      %v987 = vpop.f32.mrf.mxu0
      %988 = vmatprep.mubr.bf16.mxu0 0
      %989 = vmatmul.mubr.bf16.gmra.mxu0 %v528
      %v990 = vpop.f32.mrf.mxu0
      %v991 = vadd.f32 0.0, %v990
      %v992 = vpop.f32.mrf.mxu0
      %v993 = vpop.f32.mrf.mxu0
      %v994 = vadd.f32 0.0, %v993
      %v995 = vpop.f32.mrf.mxu0
      %996 = vmatprep.mubr.bf16.mxu0 0
      %997 = vmatmul.mubr.bf16.gmra.mxu0 %v529
      %v998 = vpop.f32.mrf.mxu0
      %v999 = vadd.f32 0.0, %v998
      %v1000 = vpop.f32.mrf.mxu0
      %v1001 = vpop.f32.mrf.mxu0
      %v1002 = vadd.f32 0.0, %v1001
      %v1003 = vpop.f32.mrf.mxu0
      %1004 = vmatprep.mubr.bf16.mxu0 0
      %1005 = vmatmul.mubr.bf16.gmra.mxu0 %v530
      %v1006 = vpop.f32.mrf.mxu0
      %v1007 = vadd.f32 0.0, %v1006
      %v1008 = vpop.f32.mrf.mxu0
      %v1009 = vpop.f32.mrf.mxu0
      %v1010 = vadd.f32 0.0, %v1009
      %v1011 = vpop.f32.mrf.mxu0
      %1012 = vmatprep.mubr.bf16.mxu0 0
      %1013 = vmatmul.mubr.bf16.gmra.mxu0 %v531
      %v1014 = vpop.f32.mrf.mxu0
      %v1015 = vadd.f32 0.0, %v1014
      %v1016 = vpop.f32.mrf.mxu0
      %v1017 = vpop.f32.mrf.mxu0
      %v1018 = vadd.f32 0.0, %v1017
      %v1019 = vpop.f32.mrf.mxu0
      %1020 = vmatprep.mubr.bf16.mxu0 0
      %1021 = vmatmul.mubr.bf16.gmra.mxu0 %v532
      %v1022 = vpop.f32.mrf.mxu0
      %v1023 = vadd.f32 0.0, %v1022
      %v1024 = vpop.f32.mrf.mxu0
      %v1025 = vpop.f32.mrf.mxu0
      %v1026 = vadd.f32 0.0, %v1025
      %v1027 = vpop.f32.mrf.mxu0
      %1028 = vmatprep.mubr.bf16.mxu0 0
      %1029 = vmatmul.mubr.bf16.gmra.mxu0 %v533
      %v1030 = vpop.f32.mrf.mxu0
      %v1031 = vadd.f32 0.0, %v1030
      %v1032 = vpop.f32.mrf.mxu0
      %v1033 = vpop.f32.mrf.mxu0
      %v1034 = vadd.f32 0.0, %v1033
      %v1035 = vpop.f32.mrf.mxu0
      %1036 = vmatprep.mubr.bf16.mxu0 0
      %1037 = vmatmul.mubr.bf16.gmra.mxu0 %v534
      %v1038 = vpop.f32.mrf.mxu0
      %v1039 = vadd.f32 0.0, %v1038
      %v1040 = vpop.f32.mrf.mxu0
      %v1041 = vpop.f32.mrf.mxu0
      %v1042 = vadd.f32 0.0, %v1041
      %v1043 = vpop.f32.mrf.mxu0
      %1044 = vmatprep.mubr.bf16.mxu0 0
      %1045 = vmatmul.mubr.bf16.gmra.mxu0 %v535
      %v1046 = vpop.f32.mrf.mxu0
      %v1047 = vadd.f32 0.0, %v1046
      %v1048 = vpop.f32.mrf.mxu0
      %v1049 = vpop.f32.mrf.mxu0
      %v1050 = vadd.f32 0.0, %v1049
      %v1051 = vpop.f32.mrf.mxu0
      %1052 = vmatprep.mubr.bf16.mxu0 0
      %1053 = vmatmul.mubr.bf16.gmra.mxu0 %v536
      %v1054 = vpop.f32.mrf.mxu0
      %v1055 = vadd.f32 0.0, %v1054
      %v1056 = vpop.f32.mrf.mxu0
      %v1057 = vpop.f32.mrf.mxu0
      %v1058 = vadd.f32 0.0, %v1057
      %v1059 = vpop.f32.mrf.mxu0
      %1060 = vmatprep.mubr.bf16.mxu0 0
      %1061 = vmatmul.mubr.bf16.gmra.mxu0 %v537
      %v1062 = vpop.f32.mrf.mxu0
      %v1063 = vadd.f32 0.0, %v1062
      %v1064 = vpop.f32.mrf.mxu0
      %v1065 = vpop.f32.mrf.mxu0
      %v1066 = vadd.f32 0.0, %v1065
      %v1067 = vpop.f32.mrf.mxu0
      %1068 = vdwg.mxu0
      %v1069 = vmax.f32 %v671, %v770
      %v1070 = vmax.f32 %v674, %v775
      %v1071 = vmax.f32 %v679, %v778
      %v1072 = vmax.f32 %v682, %v783
      %v1073 = vmax.f32 %v687, %v786
      %v1074 = vmax.f32 %v690, %v791
      %v1075 = vmax.f32 %v695, %v794
      %v1076 = vmax.f32 %v698, %v799
      %v1077 = vmax.f32 %v703, %v802
      %v1078 = vmax.f32 %v706, %v807
      %v1079 = vmax.f32 %v711, %v810
      %v1080 = vmax.f32 %v714, %v815
      %v1081 = vmax.f32 %v719, %v818
      %v1082 = vmax.f32 %v722, %v823
      %v1083 = vmax.f32 %v727, %v826
      %v1084 = vmax.f32 %v730, %v831
      %v1085 = vmax.f32 %v735, %v834
      %v1086 = vmax.f32 %v738, %v839
      %v1087 = vmax.f32 %v743, %v842
      %v1088 = vmax.f32 %v746, %v847
      %v1089 = vmax.f32 %v751, %v850
      %v1090 = vmax.f32 %v754, %v855
      %v1091 = vmax.f32 %v759, %v858
      %v1092 = vmax.f32 %v762, %v863
      %v1093 = vmax.f32 %v767, %v866
      %v1094 = vmax.f32 %v871, %v970
      %v1095 = vmax.f32 %v874, %v975
      %v1096 = vmax.f32 %v879, %v978
      %v1097 = vmax.f32 %v882, %v983
      %v1098 = vmax.f32 %v887, %v986
      %v1099 = vmax.f32 %v890, %v991
      %v1100 = vmax.f32 %v895, %v994
      %v1101 = vmax.f32 %v898, %v999
      %v1102 = vmax.f32 %v903, %v1002
      %v1103 = vmax.f32 %v906, %v1007
      %v1104 = vmax.f32 %v911, %v1010
      %v1105 = vmax.f32 %v914, %v1015
      %v1106 = vmax.f32 %v919, %v1018
      %v1107 = vmax.f32 %v922, %v1023
      %v1108 = vmax.f32 %v927, %v1026
      %v1109 = vmax.f32 %v930, %v1031
      %v1110 = vmax.f32 %v935, %v1034
      %v1111 = vmax.f32 %v938, %v1039
      %v1112 = vmax.f32 %v943, %v1042
      %v1113 = vmax.f32 %v946, %v1047
      %v1114 = vmax.f32 %v951, %v1050
      %v1115 = vmax.f32 %v954, %v1055
      %v1116 = vmax.f32 %v959, %v1058
      %v1117 = vmax.f32 %v962, %v1063
      %v1118 = vmax.f32 %v967, %v1066
      %v1119 = vmax.f32 %v1069, %v1094
      %v1120 = vmax.f32 %v1070, %v1095
      %v1121 = vmax.f32 %v1071, %v1096
      %v1122 = vmax.f32 %v1072, %v1097
      %v1123 = vmax.f32 %v1073, %v1098
      %v1124 = vmax.f32 %v1074, %v1099
      %v1125 = vmax.f32 %v1075, %v1100
      %v1126 = vmax.f32 %v1076, %v1101
      %v1127 = vmax.f32 %v1077, %v1102
      %v1128 = vmax.f32 %v1078, %v1103
      %v1129 = vmax.f32 %v1079, %v1104
      %v1130 = vmax.f32 %v1080, %v1105
      %v1131 = vmax.f32 %v1081, %v1106
      %v1132 = vmax.f32 %v1082, %v1107
      %v1133 = vmax.f32 %v1083, %v1108
      %v1134 = vmax.f32 %v1084, %v1109
      %v1135 = vmax.f32 %v1085, %v1110
      %v1136 = vmax.f32 %v1086, %v1111
      %v1137 = vmax.f32 %v1087, %v1112
      %v1138 = vmax.f32 %v1088, %v1113
      %v1139 = vmax.f32 %v1089, %v1114
      %v1140 = vmax.f32 %v1090, %v1115
      %v1141 = vmax.f32 %v1091, %v1116
      %v1142 = vmax.f32 %v1092, %v1117
      %v1143 = vmax.f32 %v1093, %v1118
      %v1144 = vld [vmem:[%s2] sm:$0x1]
      %v1146 = vlaneseq
      %v1147 = vshrl.u32 %v1146, 7
      %v1148 = vsub.s32 0, %v1147
      %v1149 = vrot.slane %v1144, %v1148
      %v1151 = vadd.f32 %v1119, %v1149
      %v1152 = vadd.f32 %v1120, %v1149
      %v1153 = vadd.f32 %v1121, %v1149
      %v1154 = vadd.f32 %v1122, %v1149
      %v1155 = vadd.f32 %v1123, %v1149
      %v1156 = vadd.f32 %v1124, %v1149
      %v1157 = vadd.f32 %v1125, %v1149
      %v1158 = vadd.f32 %v1126, %v1149
      %v1159 = vadd.f32 %v1127, %v1149
      %v1160 = vadd.f32 %v1128, %v1149
      %v1161 = vadd.f32 %v1129, %v1149
      %v1162 = vadd.f32 %v1130, %v1149
      %v1163 = vadd.f32 %v1131, %v1149
      %v1164 = vadd.f32 %v1132, %v1149
      %v1165 = vadd.f32 %v1133, %v1149
      %v1166 = vadd.f32 %v1134, %v1149
      %v1167 = vadd.f32 %v1135, %v1149
      %v1168 = vadd.f32 %v1136, %v1149
      %v1169 = vadd.f32 %v1137, %v1149
      %v1170 = vadd.f32 %v1138, %v1149
      %v1171 = vadd.f32 %v1139, %v1149
      %v1172 = vadd.f32 %v1140, %v1149
      %v1173 = vadd.f32 %v1141, %v1149
      %v1174 = vadd.f32 %v1142, %v1149
      %v1175 = vadd.f32 %v1143, %v1149
      %v1176 = vmax.f32 %v1151, 0.0
      %v1177 = vmax.f32 %v1152, 0.0
      %v1178 = vmax.f32 %v1153, 0.0
      %v1179 = vmax.f32 %v1154, 0.0
      %v1180 = vmax.f32 %v1155, 0.0
      %v1181 = vmax.f32 %v1156, 0.0
      %v1182 = vmax.f32 %v1157, 0.0
      %v1183 = vmax.f32 %v1158, 0.0
      %v1184 = vmax.f32 %v1159, 0.0
      %v1185 = vmax.f32 %v1160, 0.0
      %v1186 = vmax.f32 %v1161, 0.0
      %v1187 = vmax.f32 %v1162, 0.0
      %v1188 = vmax.f32 %v1163, 0.0
      %v1189 = vmax.f32 %v1164, 0.0
      %v1190 = vmax.f32 %v1165, 0.0
      %v1191 = vmax.f32 %v1166, 0.0
      %v1192 = vmax.f32 %v1167, 0.0
      %v1193 = vmax.f32 %v1168, 0.0
      %v1194 = vmax.f32 %v1169, 0.0
      %v1195 = vmax.f32 %v1170, 0.0
      %v1196 = vmax.f32 %v1171, 0.0
      %v1197 = vmax.f32 %v1172, 0.0
      %v1198 = vmax.f32 %v1173, 0.0
      %v1199 = vmax.f32 %v1174, 0.0
      %v1200 = vmax.f32 %v1175, 0.0
      %v1201 = vpack.c.bf16 %v1177, %v1176
      %v1202 = vpack.c.bf16 %v1179, %v1178
      %v1203 = vpack.c.bf16 %v1181, %v1180
      %v1204 = vpack.c.bf16 %v1183, %v1182
      %v1205 = vpack.c.bf16 %v1185, %v1184
      %v1206 = vpack.c.bf16 %v1187, %v1186
      %v1207 = vpack.c.bf16 %v1189, %v1188
      %v1208 = vpack.c.bf16 %v1191, %v1190
      %v1209 = vpack.c.bf16 %v1193, %v1192
      %v1210 = vpack.c.bf16 %v1195, %v1194
      %v1211 = vpack.c.bf16 %v1197, %v1196
      %v1212 = vpack.c.bf16 %v1199, %v1198
      %v1213 = vpack.c.bf16 %v1200, %v1200
      %v1227 = vunpack.c.l.b16 %v1201
      %v1228 = vunpack.c.h.b16 %v1201
      %v1229 = vunpack.c.l.b16 %v1202
      %v1230 = vunpack.c.h.b16 %v1202
      %v1231 = vunpack.c.l.b16 %v1203
      %v1232 = vunpack.c.h.b16 %v1203
      %v1233 = vunpack.c.l.b16 %v1204
      %v1234 = vunpack.c.h.b16 %v1204
      %v1235 = vunpack.c.l.b16 %v1205
      %v1236 = vunpack.c.h.b16 %v1205
      %v1237 = vunpack.c.l.b16 %v1206
      %v1238 = vunpack.c.h.b16 %v1206
      %v1239 = vunpack.c.l.b16 %v1207
      %v1240 = vunpack.c.h.b16 %v1207
      %v1241 = vunpack.c.l.b16 %v1208
      %v1242 = vunpack.c.h.b16 %v1208
      %v1243 = vunpack.c.l.b16 %v1209
      %v1244 = vunpack.c.h.b16 %v1209
      %v1245 = vunpack.c.l.b16 %v1210
      %v1246 = vunpack.c.h.b16 %v1210
      %v1247 = vunpack.c.l.b16 %v1211
      %v1248 = vunpack.c.h.b16 %v1211
      %v1249 = vunpack.c.l.b16 %v1212
      %v1250 = vunpack.c.h.b16 %v1212
      %v1251 = vunpack.c.l.b16 %v1213
      %v1252 = vpack.c.b16 %v1227, %v1227
      %v1253 = vpack.c.b16 %v1228, %v1228
      %v1254 = vpack.c.b16 %v1229, %v1229
      %v1255 = vpack.c.b16 %v1230, %v1230
      %v1256 = vpack.c.b16 %v1231, %v1231
      %v1257 = vpack.c.b16 %v1232, %v1232
      %v1258 = vpack.c.b16 %v1233, %v1233
      %v1259 = vpack.c.b16 %v1234, %v1234
      %v1260 = vpack.c.b16 %v1235, %v1235
      %v1261 = vpack.c.b16 %v1236, %v1236
      %v1262 = vpack.c.b16 %v1237, %v1237
      %v1263 = vpack.c.b16 %v1238, %v1238
      %v1264 = vpack.c.b16 %v1239, %v1239
      %v1265 = vpack.c.b16 %v1240, %v1240
      %v1266 = vpack.c.b16 %v1241, %v1241
      %v1267 = vpack.c.b16 %v1242, %v1242
      %v1268 = vpack.c.b16 %v1243, %v1243
      %v1269 = vpack.c.b16 %v1244, %v1244
      %v1270 = vpack.c.b16 %v1245, %v1245
      %v1271 = vpack.c.b16 %v1246, %v1246
      %v1272 = vpack.c.b16 %v1247, %v1247
      %v1273 = vpack.c.b16 %v1248, %v1248
      %v1274 = vpack.c.b16 %v1249, %v1249
      %v1275 = vpack.c.b16 %v1250, %v1250
      %v1276 = vpack.c.b16 %v1251, %v1251
      %1302 = vst [vmem:[%s170] sm:$0xf] %v1252
      %1303 = vst [vmem:[%s170 + $0x4] sm:$0xf] %v1253
      %1304 = vst [vmem:[%s170 + $0x8] sm:$0xf] %v1254
      %1305 = vst [vmem:[%s170 + $0xc] sm:$0xf] %v1255
      %1306 = vst [vmem:[%s170 + $0x10] sm:$0xf] %v1256
      %1307 = vst [vmem:[%s170 + $0x14] sm:$0xf] %v1257
      %1308 = vst [vmem:[%s170 + $0x18] sm:$0xf] %v1258
      %1309 = vst [vmem:[%s170 + $0x1c] sm:$0xf] %v1259
      %1310 = vst [vmem:[%s170 + $0x20] sm:$0xf] %v1260
      %1311 = vst [vmem:[%s170 + $0x24] sm:$0xf] %v1261
      %1312 = vst [vmem:[%s170 + $0x28] sm:$0xf] %v1262
      %1313 = vst [vmem:[%s170 + $0x2c] sm:$0xf] %v1263
      %1314 = vst [vmem:[%s170 + $0x30] sm:$0xf] %v1264
      %1315 = vst [vmem:[%s170 + $0x34] sm:$0xf] %v1265
      %1316 = vst [vmem:[%s170 + $0x38] sm:$0xf] %v1266
      %1317 = vst [vmem:[%s170 + $0x3c] sm:$0xf] %v1267
      %1318 = vst [vmem:[%s170 + $0x40] sm:$0xf] %v1268
      %1319 = vst [vmem:[%s170 + $0x44] sm:$0xf] %v1269
      %1320 = vst [vmem:[%s170 + $0x48] sm:$0xf] %v1270
      %1321 = vst [vmem:[%s170 + $0x4c] sm:$0xf] %v1271
      %1322 = vst [vmem:[%s170 + $0x50] sm:$0xf] %v1272
      %1323 = vst [vmem:[%s170 + $0x54] sm:$0xf] %v1273
      %1324 = vst [vmem:[%s170 + $0x58] sm:$0xf] %v1274
      %1325 = vst [vmem:[%s170 + $0x5c] sm:$0xf] %v1275
      %1326 = vst [vmem:[%s170 + $0x60] sm:$0xf] %v1276
      %p1327 = scmp.lt.s32.totalorder %s14, 1
      %s1328 = scalar_select %p1327, %s14, 1
      %s1329 = smul.addr %s1328, 25
      %s1330 = smul.addr %s1329, 4
      %s1331 = scalar_lea.vmem %s3, %s1330
      // Predicated region
      $region33: #{net_forward.3} parent=31 // pred_check
        %p1332 = pneg %p100
      $region34: #{net_forward.3} parent=31 // pred_check_branch
        %1334 = sbr.rel (%p1332) target = $region36
      $region35: #{net_forward.3} parent=31 // pred_region
        _
      $region36: #{net_forward.3} parent=31 // pred_fallthru
        _
    $region32: #{net_forward.3} parent=5 // pred_fallthru
      _
    %p1335 = scmp.le.s32.totalorder 2, %s9
    // Predicated region
    $region37: #{net_forward.3} parent=5 // pred_check
      %p1336 = pneg %p1335
    $region38: #{net_forward.3} parent=5 // pred_check_branch
      %1338 = sbr.rel (%p1336) target = $region40
    $region39: #{net_forward.3} parent=5 // pred_region
      %s1339 = ssub.s32 %s9, 2
      // Predicated region
      $region41: #{net_forward.3} parent=39 // pred_check
        %p1340 = pneg %p106
      $region42: #{net_forward.3} parent=39 // pred_check_branch
        %1342 = sbr.rel (%p1340) target = $region44
      $region43: #{net_forward.3} parent=39 // pred_region
        %p1343 = scmp.lt.s32.totalorder %s15, 1
        %s1344 = scalar_select %p1343, %s15, 1
        %s1345 = smul.addr %s1344, 25
        %s1346 = smul.addr %s1345, 4
        %s1347 = scalar_lea.vmem %s3, %s1346
      $region44: #{net_forward.3} parent=39 // pred_fallthru
        _
    $region40: #{net_forward.3} parent=5 // pred_fallthru
      _
  $region6: #{net_forward.3} parent=0 // loop_footer
    %s13 = sadd.s32 1, %s9
  $region7: #{net_forward.3} parent=0 // loop_footer_branch
    %8 = sbr.rel target = $region3
  $region8: #{net_forward.3} parent=0 // loop_exit
    _

// kernel: net_forward.4
$region0: #{net_forward.4}
  #allocation0 [shape = 'u32[]', space=smem, size = 0x4, offset = 0x4, fixed_abs, tag = 'smem constant byte address 0x4 - core index']
  #allocation1 [shape = 'u32[144,128]{1,0:T(1,128)}', space=vmem, size = 0x12000, scoped, tag = 'internal scratch']
  %s0 = inlined_call_operand.vmem [shape: bf16[2,128,256], index: 0, kind: input, shape index: {}]
  %s1 = inlined_call_operand.vmem [shape: bf16[256,128], index: 1, kind: input, shape index: {}]
  %s2 = inlined_call_operand.vmem [shape: f32[1,128], index: 2, kind: input, shape index: {}]
  %s3 = inlined_call_operand.vmem [shape: bf16[2,32,128], index: 3, kind: output, shape index: {}]
  %s4 = sld [smem:[#allocation0]]
  $region45: #{net_forward.4} parent=0
    _
  %s6 = ssub.s32 1, %s4
  %s7 = scalar_select 0, %s6, %s4
  loop: start=0, step=1, limit=4
  $region2: #{net_forward.4} parent=0 // loop_pre_header
    _
  $region3: #{net_forward.4} parent=0 // loop_header
    %s9 = sphi 0, %s13
    %p10 = scmp.ge.s32.totalorder %s9, 4
    %s19 = sphi 0, %s21
    %s22 = sphi 0, %s19
    %s23 = sphi 0, %s22
    %s39 = sphi 0, %s23
    %s43 = sphi 0, %s43
    %s45 = sphi 0, %s43
    %s46 = sphi 0, %s45
    %s60 = sphi 0, %s46
    %s64 = sphi 0, %s64
    %s66 = sphi 0, %s64
    %s67 = sphi 0, %s66
    %s81 = sphi 0, %s67
    %s87 = sphi 0, %s89
    %s90 = sphi 0, %s87
    %s91 = sphi 0, %s90
    %s107 = sphi 0, %s91
  $region4: #{net_forward.4} parent=0 // loop_header_branch
    %12 = sbr.rel (%p10) target = $region8
  $region5: #{net_forward.4} parent=0 // loop_body
    %s14 = ssub.s32 %s9, 1
    %s15 = ssub.s32 %s9, 2
    %s16 = sadd.s32 %s9, 1
    %s17 = ssub.s32 %s9, %s16
    %p18 = scmp.eq.s32.totalorder %s17, 0
    %s20 = sadd.s32 %s19, 1
    %s21 = scalar_select %p18, %s19, %s20
    %p24 = pneg %p18
    %p25 = scmp.eq.s32.totalorder %s9, 1
    %p26 = por %p24, %p25
    %p27 = scmp.ne.s32.totalorder %s19, %s22
    %p28 = scmp.eq.s32.totalorder %s9, 0
    %p29 = por %p27, %p28
    %p30 = scmp.ne.s32.totalorder %s19, %s22
    %p31 = scmp.eq.s32.totalorder %s14, 1
    %p32 = por %p30, %p31
    %p33 = scmp.ne.s32.totalorder %s22, %s23
    %p34 = scmp.eq.s32.totalorder %s14, 0
    %p35 = por %p33, %p34
    %p36 = scmp.ne.s32.totalorder %s22, %s23
    %p37 = scmp.eq.s32.totalorder %s15, 1
    %p38 = por %p36, %p37
    %p40 = scmp.ne.s32.totalorder %s23, %s39
    %p41 = scmp.eq.s32.totalorder %s15, 0
    %p42 = por %p40, %p41
    %s44 = sadd.s32 %s43, 1
    %p47 = scmp.eq.s32.totalorder %s9, 1
    %p48 = scmp.ne.s32.totalorder %s43, %s45
    %p49 = scmp.eq.s32.totalorder %s9, 0
    %p50 = por %p48, %p49
    %p51 = scmp.ne.s32.totalorder %s43, %s45
    %p52 = scmp.eq.s32.totalorder %s14, 1
    %p53 = por %p51, %p52
    %p54 = scmp.ne.s32.totalorder %s45, %s46
    %p55 = scmp.eq.s32.totalorder %s14, 0
    %p56 = por %p54, %p55
    %p57 = scmp.ne.s32.totalorder %s45, %s46
    %p58 = scmp.eq.s32.totalorder %s15, 1
    %p59 = por %p57, %p58
    %p61 = scmp.ne.s32.totalorder %s46, %s60
    %p62 = scmp.eq.s32.totalorder %s15, 0
    %p63 = por %p61, %p62
    %s65 = sadd.s32 %s64, 1
    %p68 = scmp.eq.s32.totalorder %s9, 1
    %p69 = scmp.ne.s32.totalorder %s64, %s66
    %p70 = scmp.eq.s32.totalorder %s9, 0
    %p71 = por %p69, %p70
    %p72 = scmp.ne.s32.totalorder %s64, %s66
    %p73 = scmp.eq.s32.totalorder %s14, 1
    %p74 = por %p72, %p73
    %p75 = scmp.ne.s32.totalorder %s66, %s67
    %p76 = scmp.eq.s32.totalorder %s14, 0
    %p77 = por %p75, %p76
    %p78 = scmp.ne.s32.totalorder %s66, %s67
    %p79 = scmp.eq.s32.totalorder %s15, 1
    %p80 = por %p78, %p79
    %p82 = scmp.ne.s32.totalorder %s67, %s81
    %p83 = scmp.eq.s32.totalorder %s15, 0
    %p84 = por %p82, %p83
    %s85 = ssub.s32 %s9, %s16
    %p86 = scmp.eq.s32.totalorder %s85, 0
    %s88 = sadd.s32 %s87, 1
    %s89 = scalar_select %p86, %s87, %s88
    %p92 = pneg %p86
    %p93 = scmp.eq.s32.totalorder %s9, 1
    %p94 = por %p92, %p93
    %p95 = scmp.ne.s32.totalorder %s87, %s90
    %p96 = scmp.eq.s32.totalorder %s9, 0
    %p97 = por %p95, %p96
    %p98 = scmp.ne.s32.totalorder %s87, %s90
    %p99 = scmp.eq.s32.totalorder %s14, 1
    %p100 = por %p98, %p99
    %p101 = scmp.ne.s32.totalorder %s90, %s91
    %p102 = scmp.eq.s32.totalorder %s14, 0
    %p103 = por %p101, %p102
    %p104 = scmp.ne.s32.totalorder %s90, %s91
    %p105 = scmp.eq.s32.totalorder %s15, 1
    %p106 = por %p104, %p105
    %p108 = scmp.ne.s32.totalorder %s91, %s107
    %p109 = scmp.eq.s32.totalorder %s15, 0
    %p110 = por %p108, %p109
    %p111 = scmp.le.s32.totalorder 1, %s9
    %p112 = scmp.lt.s32.totalorder %s9, 3
    %p113 = pnand %p111, %p112
    %p114 = pneg %p113
    // Predicated region
    $region9: #{net_forward.4} parent=5 // pred_check
      _
    $region10: #{net_forward.4} parent=5 // pred_check_branch
      %116 = sbr.rel (%p113) target = $region12
    $region11: #{net_forward.4} parent=5 // pred_region
      %s117 = ssub.s32 %s9, 1
      // Predicated region
      $region13: #{net_forward.4} parent=11 // pred_check
        %p118 = pneg %p56
      $region14: #{net_forward.4} parent=11 // pred_check_branch
        %120 = sbr.rel (%p118) target = $region16
      $region15: #{net_forward.4} parent=11 // pred_region
        _
      $region16: #{net_forward.4} parent=11 // pred_fallthru
        _
      // Predicated region
      $region17: #{net_forward.4} parent=11 // pred_check
        %p121 = pneg %p77
      $region18: #{net_forward.4} parent=11 // pred_check_branch
        %123 = sbr.rel (%p121) target = $region20
      $region19: #{net_forward.4} parent=11 // pred_region
        _
      $region20: #{net_forward.4} parent=11 // pred_fallthru
        _
    $region12: #{net_forward.4} parent=5 // pred_fallthru
      _
    %p124 = scmp.lt.s32.totalorder %s9, 2
    // Predicated region
    $region21: #{net_forward.4} parent=5 // pred_check
      %p125 = pneg %p124
    $region22: #{net_forward.4} parent=5 // pred_check_branch
      %127 = sbr.rel (%p125) target = $region24
    $region23: #{net_forward.4} parent=5 // pred_region
      // Predicated region
      $region25: #{net_forward.4} parent=23 // pred_check
        %p128 = pneg %p29
      $region26: #{net_forward.4} parent=23 // pred_check_branch
        %130 = sbr.rel (%p128) target = $region28
      $region27: #{net_forward.4} parent=23 // pred_region
        %p131 = scmp.lt.s32.totalorder %s9, 1
        %s132 = scalar_select %p131, %s9, 1
        %s133 = smul.addr %s132, 32
        %s134 = smul.addr %s133, 4
        %s135 = scalar_lea.vmem %s0, %s134
      $region28: #{net_forward.4} parent=23 // pred_fallthru
        _
    $region24: #{net_forward.4} parent=5 // pred_fallthru
      _
    %p136 = scmp.le.s32.totalorder 1, %s9
    %p137 = scmp.lt.s32.totalorder %s9, 3
    %p138 = pnand %p136, %p137
    %p139 = pneg %p138
    // Predicated region
    $region29: #{net_forward.4} parent=5 // pred_check
      _
    $region30: #{net_forward.4} parent=5 // pred_check_branch
      %141 = sbr.rel (%p138) target = $region32
    $region31: #{net_forward.4} parent=5 // pred_region
      %s142 = ssub.s32 %s9, 1
      %p143 = scmp.lt.s32.totalorder %s14, 1
      %s144 = scalar_select %p143, %s14, 1
      %s145 = smul.addr %s144, 32
      %s146 = smul.addr %s145, 4
      %s147 = scalar_lea.vmem %s0, %s146
      %p148 = pneg %p35
      %p149 = pneg %p32
      %p150 = pneg %p56
      %p151 = pneg %p53
      %p152 = pneg %p77
      %p153 = pneg %p74
      %p154 = pneg %p103
      %p155 = pneg %p100
      %p156 = scmp.lt.s32.totalorder %s14, 1
      %s157 = scalar_select %p156, %s14, 1
      %s158 = smul.addr %s157, 4
      %s159 = smul.addr %s158, 4
      %s160 = scalar_lea.vmem %s3, %s159
      %p161 = scmp.lt.s32.totalorder %s14, 1
      %s162 = scalar_select %p161, %s14, 1
      %s163 = smul.addr %s162, 32
      %s164 = smul.addr %s163, 4
      %s165 = scalar_lea.vmem %s0, %s164
      %p166 = scmp.lt.s32.totalorder %s14, 1
      %s167 = scalar_select %p166, %s14, 1
      %s168 = smul.addr %s167, 4
      %s169 = smul.addr %s168, 4
      %s170 = scalar_lea.vmem %s3, %s169
      %v172 = vld [vmem:[%s165] sm:$0xff]
      %v173 = vld [vmem:[%s165 + $0x8] sm:$0xff]
      %v174 = vld [vmem:[%s165 + $0x10] sm:$0xff]
      %v175 = vld [vmem:[%s165 + $0x18] sm:$0xff]
      %v176 = vld [vmem:[%s165 + $0x20] sm:$0xff]
      %v177 = vld [vmem:[%s165 + $0x28] sm:$0xff]
      %v178 = vld [vmem:[%s165 + $0x30] sm:$0xff]
      %v179 = vld [vmem:[%s165 + $0x38] sm:$0xff]
      %v180 = vld [vmem:[%s165 + $0x40] sm:$0xff]
      %v181 = vld [vmem:[%s165 + $0x48] sm:$0xff]
      %v182 = vld [vmem:[%s165 + $0x50] sm:$0xff]
      %v183 = vld [vmem:[%s165 + $0x58] sm:$0xff]
      %v184 = vld [vmem:[%s165 + $0x60] sm:$0xff]
      %v185 = vld [vmem:[%s165 + $0x68] sm:$0xff]
      %v186 = vld [vmem:[%s165 + $0x70] sm:$0xff]
      %v187 = vld [vmem:[%s165 + $0x78] sm:$0xff]
      %v188 = vld [vmem:[%s1] sm:$0xf]
      %v189 = vld [vmem:[%s1 + $0x4] sm:$0xf]
      %v190 = vld [vmem:[%s1 + $0x8] sm:$0xf]
      %v191 = vld [vmem:[%s1 + $0xc] sm:$0xf]
      %v192 = vld [vmem:[%s1 + $0x10] sm:$0xf]
      %v193 = vld [vmem:[%s1 + $0x14] sm:$0xf]
      %v194 = vld [vmem:[%s1 + $0x18] sm:$0xf]
      %v195 = vld [vmem:[%s1 + $0x1c] sm:$0xf]
      %v196 = vld [vmem:[%s1 + $0x20] sm:$0xf]
      %v197 = vld [vmem:[%s1 + $0x24] sm:$0xf]
      %v198 = vld [vmem:[%s1 + $0x28] sm:$0xf]
      %v199 = vld [vmem:[%s1 + $0x2c] sm:$0xf]
      %v200 = vld [vmem:[%s1 + $0x30] sm:$0xf]
      %v201 = vld [vmem:[%s1 + $0x34] sm:$0xf]
      %v202 = vld [vmem:[%s1 + $0x38] sm:$0xf]
      %v203 = vld [vmem:[%s1 + $0x3c] sm:$0xf]
      %v204 = vld [vmem:[%s1 + $0x40] sm:$0xf]
      %v205 = vld [vmem:[%s1 + $0x44] sm:$0xf]
      %v206 = vld [vmem:[%s1 + $0x48] sm:$0xf]
      %v207 = vld [vmem:[%s1 + $0x4c] sm:$0xf]
      %v208 = vld [vmem:[%s1 + $0x50] sm:$0xf]
      %v209 = vld [vmem:[%s1 + $0x54] sm:$0xf]
      %v210 = vld [vmem:[%s1 + $0x58] sm:$0xf]
      %v211 = vld [vmem:[%s1 + $0x5c] sm:$0xf]
      %v212 = vld [vmem:[%s1 + $0x60] sm:$0xf]
      %v213 = vld [vmem:[%s1 + $0x64] sm:$0xf]
      %v214 = vld [vmem:[%s1 + $0x68] sm:$0xf]
      %v215 = vld [vmem:[%s1 + $0x6c] sm:$0xf]
      %v216 = vld [vmem:[%s1 + $0x70] sm:$0xf]
      %v217 = vld [vmem:[%s1 + $0x74] sm:$0xf]
      %v218 = vld [vmem:[%s1 + $0x78] sm:$0xf]
      %v219 = vld [vmem:[%s1 + $0x7c] sm:$0xf]
      %v236 = vunpack.c.l.b16 %v172
      %v237 = vunpack.c.h.b16 %v172
      %v238 = vunpack.c.l.b16 %v173
      %v239 = vunpack.c.h.b16 %v173
      %v240 = vunpack.c.l.b16 %v174
      %v241 = vunpack.c.h.b16 %v174
      %v242 = vunpack.c.l.b16 %v175
      %v243 = vunpack.c.h.b16 %v175
      %v244 = vunpack.c.l.b16 %v176
      %v245 = vunpack.c.h.b16 %v176
      %v246 = vunpack.c.l.b16 %v177
      %v247 = vunpack.c.h.b16 %v177
      %v248 = vunpack.c.l.b16 %v178
      %v249 = vunpack.c.h.b16 %v178
      %v250 = vunpack.c.l.b16 %v179
      %v251 = vunpack.c.h.b16 %v179
      %v252 = vunpack.c.l.b16 %v180
      %v253 = vunpack.c.h.b16 %v180
      %v254 = vunpack.c.l.b16 %v181
      %v255 = vunpack.c.h.b16 %v181
      %v256 = vunpack.c.l.b16 %v182
      %v257 = vunpack.c.h.b16 %v182
      %v258 = vunpack.c.l.b16 %v183
      %v259 = vunpack.c.h.b16 %v183
      %v260 = vunpack.c.l.b16 %v184
      %v261 = vunpack.c.h.b16 %v184
      %v262 = vunpack.c.l.b16 %v185
      %v263 = vunpack.c.h.b16 %v185
      %v264 = vunpack.c.l.b16 %v186
      %v265 = vunpack.c.h.b16 %v186
      %v266 = vunpack.c.l.b16 %v187
      %v267 = vunpack.c.h.b16 %v187
      %v268 = vpack.c.b16 %v238, %v236
      %v269 = vpack.c.b16 %v239, %v237
      %v270 = vpack.c.b16 %v242, %v240
      %v271 = vpack.c.b16 %v243, %v241
      %v272 = vpack.c.b16 %v246, %v244
      %v273 = vpack.c.b16 %v247, %v245
      %v274 = vpack.c.b16 %v250, %v248
      %v275 = vpack.c.b16 %v251, %v249
      %v276 = vpack.c.b16 %v254, %v252
      %v277 = vpack.c.b16 %v255, %v253
      %v278 = vpack.c.b16 %v258, %v256
      %v279 = vpack.c.b16 %v259, %v257
      %v280 = vpack.c.b16 %v262, %v260
      %v281 = vpack.c.b16 %v263, %v261
      %v282 = vpack.c.b16 %v266, %v264
      %v283 = vpack.c.b16 %v267, %v265
      %v332 = vunpack.c.l.b16 %v188
      %v333 = vunpack.c.l.b16 %v189
      %v334 = vunpack.c.l.b16 %v190
      %v335 = vunpack.c.l.b16 %v191
      %v336 = vunpack.c.l.b16 %v192
      %v337 = vunpack.c.l.b16 %v193
      %v338 = vunpack.c.l.b16 %v194
      %v339 = vunpack.c.l.b16 %v195
      %v340 = vunpack.c.l.b16 %v196
      %v341 = vunpack.c.l.b16 %v197
      %v342 = vunpack.c.l.b16 %v198
      %v343 = vunpack.c.l.b16 %v199
      %v344 = vunpack.c.l.b16 %v200
      %v345 = vunpack.c.l.b16 %v201
      %v346 = vunpack.c.l.b16 %v202
      %v347 = vunpack.c.l.b16 %v203
      %v348 = vunpack.c.l.b16 %v204
      %v349 = vunpack.c.l.b16 %v205
      %v350 = vunpack.c.l.b16 %v206
      %v351 = vunpack.c.l.b16 %v207
      %v352 = vunpack.c.l.b16 %v208
      %v353 = vunpack.c.l.b16 %v209
      %v354 = vunpack.c.l.b16 %v210
      %v355 = vunpack.c.l.b16 %v211
      %v356 = vunpack.c.l.b16 %v212
      %v357 = vunpack.c.l.b16 %v213
      %v358 = vunpack.c.l.b16 %v214
      %v359 = vunpack.c.l.b16 %v215
      %v360 = vunpack.c.l.b16 %v216
      %v361 = vunpack.c.l.b16 %v217
      %v362 = vunpack.c.l.b16 %v218
      %v363 = vunpack.c.l.b16 %v219
      %v364 = vpack.c.b16 %v333, %v332
      %v365 = vpack.c.b16 %v335, %v334
      %v366 = vpack.c.b16 %v337, %v336
      %v367 = vpack.c.b16 %v339, %v338
      %v368 = vpack.c.b16 %v341, %v340
      %v369 = vpack.c.b16 %v343, %v342
      %v370 = vpack.c.b16 %v345, %v344
      %v371 = vpack.c.b16 %v347, %v346
      %v372 = vpack.c.b16 %v349, %v348
      %v373 = vpack.c.b16 %v351, %v350
      %v374 = vpack.c.b16 %v353, %v352
      %v375 = vpack.c.b16 %v355, %v354
      %v376 = vpack.c.b16 %v357, %v356
      %v377 = vpack.c.b16 %v359, %v358
      %v378 = vpack.c.b16 %v361, %v360
      %v379 = vpack.c.b16 %v363, %v362
      %396 = vmatprep.subr.bf16.mxu0 0
      %397 = vmatpush1.bf16.msra.mxu0 %v371
      %398 = vmatprep.subr.bf16.mxu0 0
      %399 = vmatpush1.bf16.msra.mxu0 %v370
      %400 = vmatprep.subr.bf16.mxu0 0
      %401 = vmatpush1.bf16.msra.mxu0 %v369
      %402 = vmatprep.subr.bf16.mxu0 0
      %403 = vmatpush1.bf16.msra.mxu0 %v368
      %404 = vmatprep.subr.bf16.mxu0 0
      %405 = vmatpush1.bf16.msra.mxu0 %v367
      %406 = vmatprep.subr.bf16.mxu0 0
      %407 = vmatpush1.bf16.msra.mxu0 %v366
      %408 = vmatprep.subr.bf16.mxu0 0
      %409 = vmatpush1.bf16.msra.mxu0 %v365
      %410 = vmatprep.subr.bf16.mxu0 0
      %411 = vmatpush1.bf16.msra.mxu0 %v364
      %412 = vmatprep.subr.bf16.mxu0 0
      %413 = vmatpush2.bf16.msra.mxu0 %v379
      %414 = vmatprep.subr.bf16.mxu0 0
      %415 = vmatpush2.bf16.msra.mxu0 %v378
      %416 = vmatprep.subr.bf16.mxu0 0
      %417 = vmatpush2.bf16.msra.mxu0 %v377
      %418 = vmatprep.subr.bf16.mxu0 0
      %419 = vmatpush2.bf16.msra.mxu0 %v376
      %420 = vmatprep.subr.bf16.mxu0 0
      %421 = vmatpush2.bf16.msra.mxu0 %v375
      %422 = vmatprep.subr.bf16.mxu0 0
      %423 = vmatpush2.bf16.msra.mxu0 %v374
      %424 = vmatprep.subr.bf16.mxu0 0
      %425 = vmatpush2.bf16.msra.mxu0 %v373
      %426 = vmatprep.subr.bf16.mxu0 0
      %427 = vmatpush2.bf16.msra.mxu0 %v372
      %428 = vmatprep.mubr.bf16.mxu0 %v269
      %429 = vmatmul.mubr.bf16.gmra.mxu0 %v268
      %v430 = vpop.f32.mrf.mxu0
      %v431 = vadd.f32 0.0, %v430
      %v432 = vpop.f32.mrf.mxu0
      %v433 = vpop.f32.mrf.mxu0
      %v434 = vadd.f32 0.0, %v433
      %v435 = vpop.f32.mrf.mxu0
      %436 = vmatprep.mubr.bf16.mxu0 %v271
      %437 = vmatmul.mubr.bf16.gmra.mxu0 %v270
      %v438 = vpop.f32.mrf.mxu0
      %v439 = vadd.f32 0.0, %v438
      %v440 = vpop.f32.mrf.mxu0
      %v441 = vpop.f32.mrf.mxu0
      %v442 = vadd.f32 0.0, %v441
      %v443 = vpop.f32.mrf.mxu0
      %444 = vmatprep.mubr.bf16.mxu0 %v273
      %445 = vmatmul.mubr.bf16.gmra.mxu0 %v272
      %v446 = vpop.f32.mrf.mxu0
      %v447 = vadd.f32 0.0, %v446
      %v448 = vpop.f32.mrf.mxu0
      %v449 = vpop.f32.mrf.mxu0
      %v450 = vadd.f32 0.0, %v449
      %v451 = vpop.f32.mrf.mxu0
      %452 = vmatprep.mubr.bf16.mxu0 %v275
      %453 = vmatmul.mubr.bf16.gmra.mxu0 %v274
      %v454 = vpop.f32.mrf.mxu0
      %v455 = vadd.f32 0.0, %v454
      %v456 = vpop.f32.mrf.mxu0
      %v457 = vpop.f32.mrf.mxu0
      %v458 = vadd.f32 0.0, %v457
      %v459 = vpop.f32.mrf.mxu0
      %460 = vmatprep.mubr.bf16.mxu0 %v277
      %461 = vmatmul.mubr.bf16.gmra.mxu0 %v276
      %v462 = vpop.f32.mrf.mxu0
      %v463 = vadd.f32 0.0, %v462
      %v464 = vpop.f32.mrf.mxu0
      %v465 = vpop.f32.mrf.mxu0
      %v466 = vadd.f32 0.0, %v465
      %v467 = vpop.f32.mrf.mxu0
      %468 = vmatprep.mubr.bf16.mxu0 %v279
      %469 = vmatmul.mubr.bf16.gmra.mxu0 %v278
      %v470 = vpop.f32.mrf.mxu0
      %v471 = vadd.f32 0.0, %v470
      %v472 = vpop.f32.mrf.mxu0
      %v473 = vpop.f32.mrf.mxu0
      %v474 = vadd.f32 0.0, %v473
      %v475 = vpop.f32.mrf.mxu0
      %476 = vmatprep.mubr.bf16.mxu0 %v281
      %477 = vmatmul.mubr.bf16.gmra.mxu0 %v280
      %v478 = vpop.f32.mrf.mxu0
      %v479 = vadd.f32 0.0, %v478
      %v480 = vpop.f32.mrf.mxu0
      %v481 = vpop.f32.mrf.mxu0
      %v482 = vadd.f32 0.0, %v481
      %v483 = vpop.f32.mrf.mxu0
      %484 = vmatprep.mubr.bf16.mxu0 %v283
      %485 = vmatmul.mubr.bf16.gmra.mxu0 %v282
      %v486 = vpop.f32.mrf.mxu0
      %v487 = vadd.f32 0.0, %v486
      %v488 = vpop.f32.mrf.mxu0
      %v489 = vpop.f32.mrf.mxu0
      %v490 = vadd.f32 0.0, %v489
      %v491 = vpop.f32.mrf.mxu0
      %492 = vdwg.mxu0
      %v493 = vmax.f32 %v431, %v447
      %v494 = vmax.f32 %v434, %v450
      %v495 = vmax.f32 %v439, %v455
      %v496 = vmax.f32 %v442, %v458
      %v497 = vmax.f32 %v463, %v479
      %v498 = vmax.f32 %v466, %v482
      %v499 = vmax.f32 %v471, %v487
      %v500 = vmax.f32 %v474, %v490
      %v501 = vmax.f32 %v493, %v497
      %v502 = vmax.f32 %v494, %v498
      %v503 = vmax.f32 %v495, %v499
      %v504 = vmax.f32 %v496, %v500
      %v505 = vld [vmem:[%s2] sm:$0x1]
      %v507 = vlaneseq
      %v508 = vshrl.u32 %v507, 7
      %v509 = vsub.s32 0, %v508
      %v510 = vrot.slane %v505, %v509
      %v512 = vadd.f32 %v501, %v510
      %v513 = vadd.f32 %v502, %v510
      %v514 = vadd.f32 %v503, %v510
      %v515 = vadd.f32 %v504, %v510
      %v516 = vmax.f32 %v512, 0.0
      %v517 = vmax.f32 %v513, 0.0
      %v518 = vmax.f32 %v514, 0.0
      %v519 = vmax.f32 %v515, 0.0
      %v520 = vpack.c.bf16 %v517, %v516
      %v521 = vpack.c.bf16 %v519, %v518
      %v524 = vunpack.c.l.b16 %v520
      %v525 = vunpack.c.h.b16 %v520
      %v526 = vunpack.c.l.b16 %v521
      %v527 = vunpack.c.h.b16 %v521
      %v528 = vpack.c.b16 %v524, %v524
      %v529 = vpack.c.b16 %v525, %v525
      %v530 = vpack.c.b16 %v526, %v526
      %v531 = vpack.c.b16 %v527, %v527
      %536 = vst [vmem:[%s170] sm:$0xf] %v528
      %537 = vst [vmem:[%s170 + $0x4] sm:$0xf] %v529
      %538 = vst [vmem:[%s170 + $0x8] sm:$0xf] %v530
      %539 = vst [vmem:[%s170 + $0xc] sm:$0xf] %v531
      %p540 = scmp.lt.s32.totalorder %s14, 1
      %s541 = scalar_select %p540, %s14, 1
      %s542 = smul.addr %s541, 4
      %s543 = smul.addr %s542, 4
      %s544 = scalar_lea.vmem %s3, %s543
      // Predicated region
      $region33: #{net_forward.4} parent=31 // pred_check
        %p545 = pneg %p100
      $region34: #{net_forward.4} parent=31 // pred_check_branch
        %547 = sbr.rel (%p545) target = $region36
      $region35: #{net_forward.4} parent=31 // pred_region
        _
      $region36: #{net_forward.4} parent=31 // pred_fallthru
        _
    $region32: #{net_forward.4} parent=5 // pred_fallthru
      _
    %p548 = scmp.le.s32.totalorder 2, %s9
    // Predicated region
    $region37: #{net_forward.4} parent=5 // pred_check
      %p549 = pneg %p548
    $region38: #{net_forward.4} parent=5 // pred_check_branch
      %551 = sbr.rel (%p549) target = $region40
    $region39: #{net_forward.4} parent=5 // pred_region
      %s552 = ssub.s32 %s9, 2
      // Predicated region
      $region41: #{net_forward.4} parent=39 // pred_check
        %p553 = pneg %p106
      $region42: #{net_forward.4} parent=39 // pred_check_branch
        %555 = sbr.rel (%p553) target = $region44
      $region43: #{net_forward.4} parent=39 // pred_region
        %p556 = scmp.lt.s32.totalorder %s15, 1
        %s557 = scalar_select %p556, %s15, 1
        %s558 = smul.addr %s557, 4
        %s559 = smul.addr %s558, 4
        %s560 = scalar_lea.vmem %s3, %s559
      $region44: #{net_forward.4} parent=39 // pred_fallthru
        _
    $region40: #{net_forward.4} parent=5 // pred_fallthru
      _
  $region6: #{net_forward.4} parent=0 // loop_footer
    %s13 = sadd.s32 1, %s9
  $region7: #{net_forward.4} parent=0 // loop_footer_branch
    %8 = sbr.rel target = $region3
  $region8: #{net_forward.4} parent=0 // loop_exit
    _

// kernel: net_forward.5
$region0: #{net_forward.5}
  #allocation0 [shape = 'u32[]', space=smem, size = 0x4, offset = 0x4, fixed_abs, tag = 'smem constant byte address 0x4 - core index']
  #allocation1 [shape = 'u32[144,128]{1,0:T(1,128)}', space=vmem, size = 0x12000, scoped, tag = 'internal scratch']
  %s0 = inlined_call_operand.vmem [shape: bf16[2,512], index: 0, kind: input, shape index: {}]
  %s1 = inlined_call_operand.vmem [shape: bf16[512,128], index: 1, kind: input, shape index: {}]
  %s2 = inlined_call_operand.vmem [shape: f32[1,128], index: 2, kind: input, shape index: {}]
  %s3 = inlined_call_operand.vmem [shape: bf16[128,128], index: 3, kind: input, shape index: {}]
  %s4 = inlined_call_operand.vmem [shape: f32[1,128], index: 4, kind: input, shape index: {}]
  %s5 = inlined_call_operand.vmem [shape: bf16[128,128], index: 5, kind: input, shape index: {}]
  %s6 = inlined_call_operand.vmem [shape: f32[1,128], index: 6, kind: input, shape index: {}]
  %s7 = inlined_call_operand.hbm [shape: f32[2,128], index: 7, kind: output, shape index: {}]
  %s8 = sld [smem:[#allocation0]]
  $region38: #{net_forward.5} parent=0
    _
  %s10 = ssub.s32 1, %s8
  %s11 = scalar_select 0, %s10, %s8
  $region1: #{net_forward.5} parent=0
    #allocation2 [shape = 'u8[1024]{0}', space=vmem, size = 0x400, scoped, tag = 'output window, operand 0, single buffered']
    #allocation3 [shape = 's32[1]{0}', space=sflag, size = 0x4, scoped, tag = 'scoped memory for net_forward.5']
    %12 = vsyncpa [#allocation3], 0
    // Predicated region
    $region2: #{net_forward.5} parent=1 // pred_check
      _
    $region3: #{net_forward.5} parent=1 // pred_check_branch
      %14 = sbr.rel (0) target = $region5
    $region4: #{net_forward.5} parent=1 // pred_region
      _
    $region5: #{net_forward.5} parent=1 // pred_fallthru
      _
    // Predicated region
    $region6: #{net_forward.5} parent=1 // pred_check
      _
    $region7: #{net_forward.5} parent=1 // pred_check_branch
      %16 = sbr.rel (0) target = $region9
    $region8: #{net_forward.5} parent=1 // pred_region
      _
    $region9: #{net_forward.5} parent=1 // pred_fallthru
      _
    // Predicated region
    $region10: #{net_forward.5} parent=1 // pred_check
      _
    $region11: #{net_forward.5} parent=1 // pred_check_branch
      %18 = sbr.rel (0) target = $region13
    $region12: #{net_forward.5} parent=1 // pred_region
      _
    $region13: #{net_forward.5} parent=1 // pred_fallthru
      _
    // Predicated region
    $region14: #{net_forward.5} parent=1 // pred_check
      _
    $region15: #{net_forward.5} parent=1 // pred_check_branch
      %20 = sbr.rel (0) target = $region17
    $region16: #{net_forward.5} parent=1 // pred_region
      _
    $region17: #{net_forward.5} parent=1 // pred_fallthru
      _
    // Predicated region
    $region18: #{net_forward.5} parent=1 // pred_check
      _
    $region19: #{net_forward.5} parent=1 // pred_check_branch
      %22 = sbr.rel (0) target = $region21
    $region20: #{net_forward.5} parent=1 // pred_region
      _
    $region21: #{net_forward.5} parent=1 // pred_fallthru
      _
    // Predicated region
    $region22: #{net_forward.5} parent=1 // pred_check
      _
    $region23: #{net_forward.5} parent=1 // pred_check_branch
      %24 = sbr.rel (0) target = $region25
    $region24: #{net_forward.5} parent=1 // pred_region
      _
    $region25: #{net_forward.5} parent=1 // pred_fallthru
      _
    // Predicated region
    $region26: #{net_forward.5} parent=1 // pred_check
      _
    $region27: #{net_forward.5} parent=1 // pred_check_branch
      %26 = sbr.rel (0) target = $region29
    $region28: #{net_forward.5} parent=1 // pred_region
      _
    $region29: #{net_forward.5} parent=1 // pred_fallthru
      _
    %v28 = vld [vmem:[%s0] sm:$0xf]
    %v29 = vld [vmem:[%s1] sm:$0xf]
    %v30 = vld [vmem:[%s1 + $0x4] sm:$0xf]
    %v31 = vld [vmem:[%s1 + $0x8] sm:$0xf]
    %v32 = vld [vmem:[%s1 + $0xc] sm:$0xf]
    %v33 = vld [vmem:[%s1 + $0x10] sm:$0xf]
    %v34 = vld [vmem:[%s1 + $0x14] sm:$0xf]
    %v35 = vld [vmem:[%s1 + $0x18] sm:$0xf]
    %v36 = vld [vmem:[%s1 + $0x1c] sm:$0xf]
    %v37 = vld [vmem:[%s1 + $0x20] sm:$0xf]
    %v38 = vld [vmem:[%s1 + $0x24] sm:$0xf]
    %v39 = vld [vmem:[%s1 + $0x28] sm:$0xf]
    %v40 = vld [vmem:[%s1 + $0x2c] sm:$0xf]
    %v41 = vld [vmem:[%s1 + $0x30] sm:$0xf]
    %v42 = vld [vmem:[%s1 + $0x34] sm:$0xf]
    %v43 = vld [vmem:[%s1 + $0x38] sm:$0xf]
    %v44 = vld [vmem:[%s1 + $0x3c] sm:$0xf]
    %v45 = vld [vmem:[%s1 + $0x40] sm:$0xf]
    %v46 = vld [vmem:[%s1 + $0x44] sm:$0xf]
    %v47 = vld [vmem:[%s1 + $0x48] sm:$0xf]
    %v48 = vld [vmem:[%s1 + $0x4c] sm:$0xf]
    %v49 = vld [vmem:[%s1 + $0x50] sm:$0xf]
    %v50 = vld [vmem:[%s1 + $0x54] sm:$0xf]
    %v51 = vld [vmem:[%s1 + $0x58] sm:$0xf]
    %v52 = vld [vmem:[%s1 + $0x5c] sm:$0xf]
    %v53 = vld [vmem:[%s1 + $0x60] sm:$0xf]
    %v54 = vld [vmem:[%s1 + $0x64] sm:$0xf]
    %v55 = vld [vmem:[%s1 + $0x68] sm:$0xf]
    %v56 = vld [vmem:[%s1 + $0x6c] sm:$0xf]
    %v57 = vld [vmem:[%s1 + $0x70] sm:$0xf]
    %v58 = vld [vmem:[%s1 + $0x74] sm:$0xf]
    %v59 = vld [vmem:[%s1 + $0x78] sm:$0xf]
    %v60 = vld [vmem:[%s1 + $0x7c] sm:$0xf]
    %v61 = vld [vmem:[%s1 + $0x80] sm:$0xf]
    %v62 = vld [vmem:[%s1 + $0x84] sm:$0xf]
    %v63 = vld [vmem:[%s1 + $0x88] sm:$0xf]
    %v64 = vld [vmem:[%s1 + $0x8c] sm:$0xf]
    %v65 = vld [vmem:[%s1 + $0x90] sm:$0xf]
    %v66 = vld [vmem:[%s1 + $0x94] sm:$0xf]
    %v67 = vld [vmem:[%s1 + $0x98] sm:$0xf]
    %v68 = vld [vmem:[%s1 + $0x9c] sm:$0xf]
    %v69 = vld [vmem:[%s1 + $0xa0] sm:$0xf]
    %v70 = vld [vmem:[%s1 + $0xa4] sm:$0xf]
    %v71 = vld [vmem:[%s1 + $0xa8] sm:$0xf]
    %v72 = vld [vmem:[%s1 + $0xac] sm:$0xf]
    %v73 = vld [vmem:[%s1 + $0xb0] sm:$0xf]
    %v74 = vld [vmem:[%s1 + $0xb4] sm:$0xf]
    %v75 = vld [vmem:[%s1 + $0xb8] sm:$0xf]
    %v76 = vld [vmem:[%s1 + $0xbc] sm:$0xf]
    %v77 = vld [vmem:[%s1 + $0xc0] sm:$0xf]
    %v78 = vld [vmem:[%s1 + $0xc4] sm:$0xf]
    %v79 = vld [vmem:[%s1 + $0xc8] sm:$0xf]
    %v80 = vld [vmem:[%s1 + $0xcc] sm:$0xf]
    %v81 = vld [vmem:[%s1 + $0xd0] sm:$0xf]
    %v82 = vld [vmem:[%s1 + $0xd4] sm:$0xf]
    %v83 = vld [vmem:[%s1 + $0xd8] sm:$0xf]
    %v84 = vld [vmem:[%s1 + $0xdc] sm:$0xf]
    %v85 = vld [vmem:[%s1 + $0xe0] sm:$0xf]
    %v86 = vld [vmem:[%s1 + $0xe4] sm:$0xf]
    %v87 = vld [vmem:[%s1 + $0xe8] sm:$0xf]
    %v88 = vld [vmem:[%s1 + $0xec] sm:$0xf]
    %v89 = vld [vmem:[%s1 + $0xf0] sm:$0xf]
    %v90 = vld [vmem:[%s1 + $0xf4] sm:$0xf]
    %v91 = vld [vmem:[%s1 + $0xf8] sm:$0xf]
    %v92 = vld [vmem:[%s1 + $0xfc] sm:$0xf]
    %v93 = vld [vmem:[%s2] sm:$0x1]
    %v95 = vlaneseq
    %v96 = vshrl.u32 %v95, 7
    %v97 = vsub.s32 0, %v96
    %v98 = vrot.slane %v93, %v97
    %v102 = vunpack.c.l.s4 1966171168
    %v103 = vunpack.c.0.s8 %v102
    %v104 = vlaneseq
    %v105 = vshrl.u32 %v104, 7
    %v106 = vsub.s32 %v103, %v105
    %v107 = vrot.slane %v28, %v106
    %v108 = vcombine.high %v107, %v107
    %v110 = vunpack.c.l.s4 1966171168
    %v111 = vunpack.c.0.s8 %v110
    %v112 = vlaneseq
    %v113 = vshrl.u32 %v112, 7
    %v114 = vsub.s32 %v111, %v113
    %v115 = vrot.slane %v107, %v114
    %v117 = vunpack.c.l.s4 1966171168
    %v118 = vunpack.c.0.s8 %v117
    %v119 = vlaneseq
    %v120 = vshrl.u32 %v119, 7
    %v121 = vsub.s32 %v118, %v120
    %v122 = vrot.slane %v108, %v121
    %v123 = vcombine.high %v115, %v115
    %v124 = vcombine.high %v122, %v122
    %v193 = vunpack.c.l.b16 %v29
    %v194 = vunpack.c.l.b16 %v30
    %v195 = vunpack.c.l.b16 %v31
    %v196 = vunpack.c.l.b16 %v32
    %v197 = vunpack.c.l.b16 %v33
    %v198 = vunpack.c.l.b16 %v34
    %v199 = vunpack.c.l.b16 %v35
    %v200 = vunpack.c.l.b16 %v36
    %v201 = vunpack.c.l.b16 %v37
    %v202 = vunpack.c.l.b16 %v38
    %v203 = vunpack.c.l.b16 %v39
    %v204 = vunpack.c.l.b16 %v40
    %v205 = vunpack.c.l.b16 %v41
    %v206 = vunpack.c.l.b16 %v42
    %v207 = vunpack.c.l.b16 %v43
    %v208 = vunpack.c.l.b16 %v44
    %v209 = vunpack.c.l.b16 %v45
    %v210 = vunpack.c.l.b16 %v46
    %v211 = vunpack.c.l.b16 %v47
    %v212 = vunpack.c.l.b16 %v48
    %v213 = vunpack.c.l.b16 %v49
    %v214 = vunpack.c.l.b16 %v50
    %v215 = vunpack.c.l.b16 %v51
    %v216 = vunpack.c.l.b16 %v52
    %v217 = vunpack.c.l.b16 %v53
    %v218 = vunpack.c.l.b16 %v54
    %v219 = vunpack.c.l.b16 %v55
    %v220 = vunpack.c.l.b16 %v56
    %v221 = vunpack.c.l.b16 %v57
    %v222 = vunpack.c.l.b16 %v58
    %v223 = vunpack.c.l.b16 %v59
    %v224 = vunpack.c.l.b16 %v60
    %v225 = vunpack.c.l.b16 %v61
    %v226 = vunpack.c.l.b16 %v62
    %v227 = vunpack.c.l.b16 %v63
    %v228 = vunpack.c.l.b16 %v64
    %v229 = vunpack.c.l.b16 %v65
    %v230 = vunpack.c.l.b16 %v66
    %v231 = vunpack.c.l.b16 %v67
    %v232 = vunpack.c.l.b16 %v68
    %v233 = vunpack.c.l.b16 %v69
    %v234 = vunpack.c.l.b16 %v70
    %v235 = vunpack.c.l.b16 %v71
    %v236 = vunpack.c.l.b16 %v72
    %v237 = vunpack.c.l.b16 %v73
    %v238 = vunpack.c.l.b16 %v74
    %v239 = vunpack.c.l.b16 %v75
    %v240 = vunpack.c.l.b16 %v76
    %v241 = vunpack.c.l.b16 %v77
    %v242 = vunpack.c.l.b16 %v78
    %v243 = vunpack.c.l.b16 %v79
    %v244 = vunpack.c.l.b16 %v80
    %v245 = vunpack.c.l.b16 %v81
    %v246 = vunpack.c.l.b16 %v82
    %v247 = vunpack.c.l.b16 %v83
    %v248 = vunpack.c.l.b16 %v84
    %v249 = vunpack.c.l.b16 %v85
    %v250 = vunpack.c.l.b16 %v86
    %v251 = vunpack.c.l.b16 %v87
    %v252 = vunpack.c.l.b16 %v88
    %v253 = vunpack.c.l.b16 %v89
    %v254 = vunpack.c.l.b16 %v90
    %v255 = vunpack.c.l.b16 %v91
    %v256 = vunpack.c.l.b16 %v92
    %v257 = vpack.c.b16 %v194, %v193
    %v258 = vpack.c.b16 %v196, %v195
    %v259 = vpack.c.b16 %v198, %v197
    %v260 = vpack.c.b16 %v200, %v199
    %v261 = vpack.c.b16 %v202, %v201
    %v262 = vpack.c.b16 %v204, %v203
    %v263 = vpack.c.b16 %v206, %v205
    %v264 = vpack.c.b16 %v208, %v207
    %v265 = vpack.c.b16 %v210, %v209
    %v266 = vpack.c.b16 %v212, %v211
    %v267 = vpack.c.b16 %v214, %v213
    %v268 = vpack.c.b16 %v216, %v215
    %v269 = vpack.c.b16 %v218, %v217
    %v270 = vpack.c.b16 %v220, %v219
    %v271 = vpack.c.b16 %v222, %v221
    %v272 = vpack.c.b16 %v224, %v223
    %v273 = vpack.c.b16 %v226, %v225
    %v274 = vpack.c.b16 %v228, %v227
    %v275 = vpack.c.b16 %v230, %v229
    %v276 = vpack.c.b16 %v232, %v231
    %v277 = vpack.c.b16 %v234, %v233
    %v278 = vpack.c.b16 %v236, %v235
    %v279 = vpack.c.b16 %v238, %v237
    %v280 = vpack.c.b16 %v240, %v239
    %v281 = vpack.c.b16 %v242, %v241
    %v282 = vpack.c.b16 %v244, %v243
    %v283 = vpack.c.b16 %v246, %v245
    %v284 = vpack.c.b16 %v248, %v247
    %v285 = vpack.c.b16 %v250, %v249
    %v286 = vpack.c.b16 %v252, %v251
    %v287 = vpack.c.b16 %v254, %v253
    %v288 = vpack.c.b16 %v256, %v255
    %321 = vmatprep.subr.bf16.mxu0 0
    %322 = vmatpush1.bf16.msra.mxu0 %v264
    %323 = vmatprep.subr.bf16.mxu0 0
    %324 = vmatpush1.bf16.msra.mxu0 %v263
    %325 = vmatprep.subr.bf16.mxu0 0
    %326 = vmatpush1.bf16.msra.mxu0 %v262
    %327 = vmatprep.subr.bf16.mxu0 0
    %328 = vmatpush1.bf16.msra.mxu0 %v261
    %329 = vmatprep.subr.bf16.mxu0 0
    %330 = vmatpush1.bf16.msra.mxu0 %v260
    %331 = vmatprep.subr.bf16.mxu0 0
    %332 = vmatpush1.bf16.msra.mxu0 %v259
    %333 = vmatprep.subr.bf16.mxu0 0
    %334 = vmatpush1.bf16.msra.mxu0 %v258
    %335 = vmatprep.subr.bf16.mxu0 0
    %336 = vmatpush1.bf16.msra.mxu0 %v257
    %337 = vmatprep.subr.bf16.mxu0 0
    %338 = vmatpush2.bf16.msra.mxu0 %v272
    %339 = vmatprep.subr.bf16.mxu0 0
    %340 = vmatpush2.bf16.msra.mxu0 %v271
    %341 = vmatprep.subr.bf16.mxu0 0
    %342 = vmatpush2.bf16.msra.mxu0 %v270
    %343 = vmatprep.subr.bf16.mxu0 0
    %344 = vmatpush2.bf16.msra.mxu0 %v269
    %345 = vmatprep.subr.bf16.mxu0 0
    %346 = vmatpush2.bf16.msra.mxu0 %v268
    %347 = vmatprep.subr.bf16.mxu0 0
    %348 = vmatpush2.bf16.msra.mxu0 %v267
    %349 = vmatprep.subr.bf16.mxu0 0
    %350 = vmatpush2.bf16.msra.mxu0 %v266
    %351 = vmatprep.subr.bf16.mxu0 0
    %352 = vmatpush2.bf16.msra.mxu0 %v265
    %353 = vmatprep.mubr.bf16.mxu0 %v122
    %354 = vmatmul.mubr.bf16.gmra.mxu0 %v115
    %v355 = vpop.f32.mrf.mxu0
    %v356 = vadd.f32 %v98, %v355
    %v357 = vpop.f32.mrf.mxu0
    %v358 = vpop.f32.mrf.mxu0
    %v359 = vpop.f32.mrf.mxu0
    %360 = vdwg.mxu0
    %361 = vmatprep.subr.bf16.mxu0 0
    %362 = vmatpush1.bf16.msra.mxu0 %v280
    %363 = vmatprep.subr.bf16.mxu0 0
    %364 = vmatpush1.bf16.msra.mxu0 %v279
    %365 = vmatprep.subr.bf16.mxu0 0
    %366 = vmatpush1.bf16.msra.mxu0 %v278
    %367 = vmatprep.subr.bf16.mxu0 0
    %368 = vmatpush1.bf16.msra.mxu0 %v277
    %369 = vmatprep.subr.bf16.mxu0 0
    %370 = vmatpush1.bf16.msra.mxu0 %v276
    %371 = vmatprep.subr.bf16.mxu0 0
    %372 = vmatpush1.bf16.msra.mxu0 %v275
    %373 = vmatprep.subr.bf16.mxu0 0
    %374 = vmatpush1.bf16.msra.mxu0 %v274
    %375 = vmatprep.subr.bf16.mxu0 0
    %376 = vmatpush1.bf16.msra.mxu0 %v273
    %377 = vmatprep.subr.bf16.mxu0 0
    %378 = vmatpush2.bf16.msra.mxu0 %v288
    %379 = vmatprep.subr.bf16.mxu0 0
    %380 = vmatpush2.bf16.msra.mxu0 %v287
    %381 = vmatprep.subr.bf16.mxu0 0
    %382 = vmatpush2.bf16.msra.mxu0 %v286
    %383 = vmatprep.subr.bf16.mxu0 0
    %384 = vmatpush2.bf16.msra.mxu0 %v285
    %385 = vmatprep.subr.bf16.mxu0 0
    %386 = vmatpush2.bf16.msra.mxu0 %v284
    %387 = vmatprep.subr.bf16.mxu0 0
    %388 = vmatpush2.bf16.msra.mxu0 %v283
    %389 = vmatprep.subr.bf16.mxu0 0
    %390 = vmatpush2.bf16.msra.mxu0 %v282
    %391 = vmatprep.subr.bf16.mxu0 0
    %392 = vmatpush2.bf16.msra.mxu0 %v281
    %393 = vmatprep.mubr.bf16.mxu0 %v124
    %394 = vmatmul.mubr.bf16.gmra.mxu0 %v123
    %v395 = vpop.f32.mrf.mxu0
    %v396 = vadd.f32 %v356, %v395
    %v397 = vpop.f32.mrf.mxu0
    %v398 = vpop.f32.mrf.mxu0
    %v399 = vpop.f32.mrf.mxu0
    %400 = vdwg.mxu0
    %v401 = vmax.f32 %v396, 0.0
    %v402 = vpack.c.bf16 %v401, %v401
    %v403 = vld [vmem:[%s3] sm:$0xf]
    %v404 = vld [vmem:[%s3 + $0x4] sm:$0xf]
    %v405 = vld [vmem:[%s3 + $0x8] sm:$0xf]
    %v406 = vld [vmem:[%s3 + $0xc] sm:$0xf]
    %v407 = vld [vmem:[%s3 + $0x10] sm:$0xf]
    %v408 = vld [vmem:[%s3 + $0x14] sm:$0xf]
    %v409 = vld [vmem:[%s3 + $0x18] sm:$0xf]
    %v410 = vld [vmem:[%s3 + $0x1c] sm:$0xf]
    %v411 = vld [vmem:[%s3 + $0x20] sm:$0xf]
    %v412 = vld [vmem:[%s3 + $0x24] sm:$0xf]
    %v413 = vld [vmem:[%s3 + $0x28] sm:$0xf]
    %v414 = vld [vmem:[%s3 + $0x2c] sm:$0xf]
    %v415 = vld [vmem:[%s3 + $0x30] sm:$0xf]
    %v416 = vld [vmem:[%s3 + $0x34] sm:$0xf]
    %v417 = vld [vmem:[%s3 + $0x38] sm:$0xf]
    %v418 = vld [vmem:[%s3 + $0x3c] sm:$0xf]
    %v419 = vld [vmem:[%s4] sm:$0x1]
    %v421 = vlaneseq
    %v422 = vshrl.u32 %v421, 7
    %v423 = vsub.s32 0, %v422
    %v424 = vrot.slane %v419, %v423
    %v442 = vunpack.c.l.b16 %v403
    %v443 = vunpack.c.l.b16 %v404
    %v444 = vunpack.c.l.b16 %v405
    %v445 = vunpack.c.l.b16 %v406
    %v446 = vunpack.c.l.b16 %v407
    %v447 = vunpack.c.l.b16 %v408
    %v448 = vunpack.c.l.b16 %v409
    %v449 = vunpack.c.l.b16 %v410
    %v450 = vunpack.c.l.b16 %v411
    %v451 = vunpack.c.l.b16 %v412
    %v452 = vunpack.c.l.b16 %v413
    %v453 = vunpack.c.l.b16 %v414
    %v454 = vunpack.c.l.b16 %v415
    %v455 = vunpack.c.l.b16 %v416
    %v456 = vunpack.c.l.b16 %v417
    %v457 = vunpack.c.l.b16 %v418
    %v458 = vpack.c.b16 %v443, %v442
    %v459 = vpack.c.b16 %v445, %v444
    %v460 = vpack.c.b16 %v447, %v446
    %v461 = vpack.c.b16 %v449, %v448
    %v462 = vpack.c.b16 %v451, %v450
    %v463 = vpack.c.b16 %v453, %v452
    %v464 = vpack.c.b16 %v455, %v454
    %v465 = vpack.c.b16 %v457, %v456
    %474 = vmatprep.subr.bf16.mxu0 0
    %475 = vmatpush1.bf16.msra.mxu0 %v465
    %476 = vmatprep.subr.bf16.mxu0 0
    %477 = vmatpush1.bf16.msra.mxu0 %v464
    %478 = vmatprep.subr.bf16.mxu0 0
    %479 = vmatpush1.bf16.msra.mxu0 %v463
    %480 = vmatprep.subr.bf16.mxu0 0
    %481 = vmatpush1.bf16.msra.mxu0 %v462
    %482 = vmatprep.subr.bf16.mxu0 0
    %483 = vmatpush1.bf16.msra.mxu0 %v461
    %484 = vmatprep.subr.bf16.mxu0 0
    %485 = vmatpush1.bf16.msra.mxu0 %v460
    %486 = vmatprep.subr.bf16.mxu0 0
    %487 = vmatpush1.bf16.msra.mxu0 %v459
    %488 = vmatprep.subr.bf16.mxu0 0
    %489 = vmatpush1.bf16.msra.mxu0 %v458
    %490 = vmatprep.subr.bf16.mxu0 0
    %491 = vmatpush2.bf16.msra.mxu0 0
    %492 = vmatprep.subr.bf16.mxu0 0
    %493 = vmatpush2.bf16.msra.mxu0 0
    %494 = vmatprep.subr.bf16.mxu0 0
    %495 = vmatpush2.bf16.msra.mxu0 0
    %496 = vmatprep.subr.bf16.mxu0 0
    %497 = vmatpush2.bf16.msra.mxu0 0
    %498 = vmatprep.subr.bf16.mxu0 0
    %499 = vmatpush2.bf16.msra.mxu0 0
    %500 = vmatprep.subr.bf16.mxu0 0
    %501 = vmatpush2.bf16.msra.mxu0 0
    %502 = vmatprep.subr.bf16.mxu0 0
    %503 = vmatpush2.bf16.msra.mxu0 0
    %504 = vmatprep.subr.bf16.mxu0 0
    %505 = vmatpush2.bf16.msra.mxu0 0
    %506 = vmatprep.mubr.bf16.mxu0 0
    %507 = vmatmul.mubr.bf16.gmra.mxu0 %v402
    %v508 = vpop.f32.mrf.mxu0
    %v509 = vadd.f32 %v424, %v508
    %v510 = vpop.f32.mrf.mxu0
    %v511 = vpop.f32.mrf.mxu0
    %v512 = vpop.f32.mrf.mxu0
    %513 = vdwg.mxu0
    %v514 = vmax.f32 %v509, 0.0
    %v515 = vpack.c.bf16 %v514, %v514
    %v516 = vld [vmem:[%s5] sm:$0xf]
    %v517 = vld [vmem:[%s5 + $0x4] sm:$0xf]
    %v518 = vld [vmem:[%s5 + $0x8] sm:$0xf]
    %v519 = vld [vmem:[%s5 + $0xc] sm:$0xf]
    %v520 = vld [vmem:[%s5 + $0x10] sm:$0xf]
    %v521 = vld [vmem:[%s5 + $0x14] sm:$0xf]
    %v522 = vld [vmem:[%s5 + $0x18] sm:$0xf]
    %v523 = vld [vmem:[%s5 + $0x1c] sm:$0xf]
    %v524 = vld [vmem:[%s5 + $0x20] sm:$0xf]
    %v525 = vld [vmem:[%s5 + $0x24] sm:$0xf]
    %v526 = vld [vmem:[%s5 + $0x28] sm:$0xf]
    %v527 = vld [vmem:[%s5 + $0x2c] sm:$0xf]
    %v528 = vld [vmem:[%s5 + $0x30] sm:$0xf]
    %v529 = vld [vmem:[%s5 + $0x34] sm:$0xf]
    %v530 = vld [vmem:[%s5 + $0x38] sm:$0xf]
    %v531 = vld [vmem:[%s5 + $0x3c] sm:$0xf]
    %v532 = vld [vmem:[%s6] sm:$0x1]
    %v534 = vlaneseq
    %v535 = vshrl.u32 %v534, 7
    %v536 = vsub.s32 0, %v535
    %v537 = vrot.slane %v532, %v536
    %v555 = vunpack.c.l.b16 %v516
    %v556 = vunpack.c.l.b16 %v517
    %v557 = vunpack.c.l.b16 %v518
    %v558 = vunpack.c.l.b16 %v519
    %v559 = vunpack.c.l.b16 %v520
    %v560 = vunpack.c.l.b16 %v521
    %v561 = vunpack.c.l.b16 %v522
    %v562 = vunpack.c.l.b16 %v523
    %v563 = vunpack.c.l.b16 %v524
    %v564 = vunpack.c.l.b16 %v525
    %v565 = vunpack.c.l.b16 %v526
    %v566 = vunpack.c.l.b16 %v527
    %v567 = vunpack.c.l.b16 %v528
    %v568 = vunpack.c.l.b16 %v529
    %v569 = vunpack.c.l.b16 %v530
    %v570 = vunpack.c.l.b16 %v531
    %v571 = vpack.c.b16 %v556, %v555
    %v572 = vpack.c.b16 %v558, %v557
    %v573 = vpack.c.b16 %v560, %v559
    %v574 = vpack.c.b16 %v562, %v561
    %v575 = vpack.c.b16 %v564, %v563
    %v576 = vpack.c.b16 %v566, %v565
    %v577 = vpack.c.b16 %v568, %v567
    %v578 = vpack.c.b16 %v570, %v569
    %587 = vmatprep.subr.bf16.mxu0 0
    %588 = vmatpush1.bf16.msra.mxu0 %v578
    %589 = vmatprep.subr.bf16.mxu0 0
    %590 = vmatpush1.bf16.msra.mxu0 %v577
    %591 = vmatprep.subr.bf16.mxu0 0
    %592 = vmatpush1.bf16.msra.mxu0 %v576
    %593 = vmatprep.subr.bf16.mxu0 0
    %594 = vmatpush1.bf16.msra.mxu0 %v575
    %595 = vmatprep.subr.bf16.mxu0 0
    %596 = vmatpush1.bf16.msra.mxu0 %v574
    %597 = vmatprep.subr.bf16.mxu0 0
    %598 = vmatpush1.bf16.msra.mxu0 %v573
    %599 = vmatprep.subr.bf16.mxu0 0
    %600 = vmatpush1.bf16.msra.mxu0 %v572
    %601 = vmatprep.subr.bf16.mxu0 0
    %602 = vmatpush1.bf16.msra.mxu0 %v571
    %603 = vmatprep.subr.bf16.mxu0 0
    %604 = vmatpush2.bf16.msra.mxu0 0
    %605 = vmatprep.subr.bf16.mxu0 0
    %606 = vmatpush2.bf16.msra.mxu0 0
    %607 = vmatprep.subr.bf16.mxu0 0
    %608 = vmatpush2.bf16.msra.mxu0 0
    %609 = vmatprep.subr.bf16.mxu0 0
    %610 = vmatpush2.bf16.msra.mxu0 0
    %611 = vmatprep.subr.bf16.mxu0 0
    %612 = vmatpush2.bf16.msra.mxu0 0
    %613 = vmatprep.subr.bf16.mxu0 0
    %614 = vmatpush2.bf16.msra.mxu0 0
    %615 = vmatprep.subr.bf16.mxu0 0
    %616 = vmatpush2.bf16.msra.mxu0 0
    %617 = vmatprep.subr.bf16.mxu0 0
    %618 = vmatpush2.bf16.msra.mxu0 0
    %619 = vmatprep.mubr.bf16.mxu0 0
    %620 = vmatmul.mubr.bf16.gmra.mxu0 %v515
    %v621 = vpop.f32.mrf.mxu0
    %v622 = vadd.f32 %v537, %v621
    %v623 = vpop.f32.mrf.mxu0
    %v624 = vpop.f32.mrf.mxu0
    %v625 = vpop.f32.mrf.mxu0
    %626 = vdwg.mxu0
    %627 = vst [vmem:[#allocation2] sm:$0x3] %v622
    // Predicated region
    $region30: #{net_forward.5} parent=1 // pred_check
      _
    $region31: #{net_forward.5} parent=1 // pred_check_branch
      %629 = sbr.rel (0) target = $region33
    $region32: #{net_forward.5} parent=1 // pred_region
      %s631 = ssub.s32 32, 32
      %632 = vsyncadd [#allocation3], %s631
      %s634 = sshll.u32 [#allocation2], 4
      %s635 = int_to_ptr.vmem [resolvable:$true] %s634
      %637 = dma.vmem_to_hbm [thread:$0]  %s635, 32, %s7, [#allocation3]
    $region33: #{net_forward.5} parent=1 // pred_fallthru
      _
    // Predicated region
    $region34: #{net_forward.5} parent=1 // pred_check
      _
    $region35: #{net_forward.5} parent=1 // pred_check_branch
      %639 = sbr.rel (0) target = $region37
    $region36: #{net_forward.5} parent=1 // pred_region
      %640 = dma.done [#allocation3], 32
    $region37: #{net_forward.5} parent=1 // pred_fallthru
      _
    %641 = vsyncpa [#allocation3], 1

</llo_original>
